<compile_context>
chip_gen: v6e
topology: v6e:2x2x1
jax: 0.10.0
libtpu: 0.0.40
codegen_flags: <defaults>
</compile_context>

<pallas_src>
import functools

import jax
import jax.numpy as jnp
from jax.experimental import pallas as pl
from jax.experimental.pallas import tpu as pltpu


def _make_dense_kernel(C, G, H, W, x0_ref, x1_ref, x2_ref, w_ref, b_ref, o_ref):
    # x0/x1/x2_ref: (C, Np) zero-padded depth planes at depths d-1, d, d+1,
    #               flattened over (H+2, W+2); padded row stride is Wp = W + 2.
    # w_ref       : (3, 9G, C)  per-depth-tap weight, rows ordered (kh, kw, g).
    # b_ref       : (G, 1)
    # o_ref       : (C+G, H, W) output slab at (n, :, d, :, :)
    Wp = W + 2
    L = (H - 1) * Wp + W  # flat span covering every (h, w) output (stride Wp)

    planes = (x0_ref[...], x1_ref[...], x2_ref[...])

    # 3 large matmuls, f32 accumulate.  ybig[(kh*3+kw)*G + g, j] is the
    # (kh, kw)-tap response of output channel g at padded flat position j.
    ybig = jnp.dot(w_ref[0], planes[0], preferred_element_type=jnp.float32)
    for kd in (1, 2):
        ybig = ybig + jnp.dot(w_ref[kd], planes[kd],
                              preferred_element_type=jnp.float32)

    # Redistribute the 9 spatial taps with static lane-shifted adds on the
    # reduced (G, .) result (cheap VPU/XLU work, no input reshuffling).
    acc = jnp.zeros((G, L), dtype=jnp.float32)
    for kh in range(3):
        for kw in range(3):
            t = kh * 3 + kw
            off = kh * Wp + kw
            acc = acc + ybig[t * G:(t + 1) * G, off:off + L]

    conv = jnp.maximum(acc + b_ref[...], 0.0)  # bias + ReLU, stride-Wp flat

    xc = planes[1]  # centre depth plane (for the channel-concat passthrough)

    # Write the (C+G, H, W) slab row by row (static offsets); the HBM
    # writeback is still a single block DMA per grid step.
    for h in range(H):
        src = (h + 1) * Wp + 1           # padded (h+1, 1) flat offset
        o_ref[0:C, h, :] = xc[:, src:src + W].astype(o_ref.dtype)
        b0 = h * Wp                      # conv flat base for output row h
        o_ref[C:C + G, h, :] = conv[:, b0:b0 + W].astype(o_ref.dtype)


def make_dense_forward(x, weight, bias):
    """x: (N, C, D, H, W) f32; weight: (G, C, 3, 3, 3); bias: (G,).
    Returns (N, C+G, D, H, W), matching the PyTorch module."""
    N, C, D, H, W = x.shape
    G = weight.shape[0]
    Dp, Hp, Wp = D + 2, H + 2, W + 2
    Np = Hp * Wp

    # Single fused glue pass: zero-pad D/H/W, put C next to the flattened
    # spatial axis, flatten (Hp, Wp) -> Np so the kernel needs no reshapes.
    xp = jnp.pad(x, ((0, 0), (0, 0), (1, 1), (1, 1), (1, 1)))
    xpf = jnp.transpose(xp, (0, 2, 1, 3, 4)).reshape(N, Dp, C, Np)

    # wk[kd, (kh*3+kw)*G + g, c] = weight[g, c, kd, kh, kw]
    wk = (jnp.transpose(weight, (2, 3, 4, 0, 1))
          .reshape(3, 9 * G, C).astype(jnp.float32))
    b2 = bias.reshape(G, 1).astype(jnp.float32)

    kernel = functools.partial(_make_dense_kernel, C, G, H, W)
    plane_block = (None, None, C, Np)

    out = pl.pallas_call(
        kernel,
        out_shape=jax.ShapeDtypeStruct((N, C + G, D, H, W), x.dtype),
        grid=(N, D),
        in_specs=[
            # three overlapping depth planes (d, d+1, d+2 of the padded depth)
            pl.BlockSpec(plane_block, lambda n, d: (n, d, 0, 0)),
            pl.BlockSpec(plane_block, lambda n, d: (n, d + 1, 0, 0)),
            pl.BlockSpec(plane_block, lambda n, d: (n, d + 2, 0, 0)),
            # weights / bias stay resident across the whole grid
            pl.BlockSpec((3, 9 * G, C), lambda n, d: (0, 0, 0)),
            pl.BlockSpec((G, 1), lambda n, d: (0, 0)),
        ],
        out_specs=pl.BlockSpec((None, C + G, None, H, W),
                               lambda n, d: (n, 0, d, 0, 0)),
        compiler_params=pltpu.CompilerParams(
            dimension_semantics=("parallel", "parallel"),
            vmem_limit_bytes=32 * 1024 * 1024),
    )(xpf, xpf, xpf, wk, b2)
    return out


def make_dense_reference(x, weight, bias):
    conv = jax.lax.conv_general_dilated(
        x, weight, window_strides=(1, 1, 1),
        padding=((1, 1), (1, 1), (1, 1)),
        dimension_numbers=("NCDHW", "OIDHW", "NCDHW"))
    conv = jax.nn.relu(conv + bias.reshape(1, -1, 1, 1, 1))
    return jnp.concatenate([x, conv], axis=1)


if __name__ == "__main__":
    # small shapes consistent with the module: N=2, nChannels=4, GrowthRate=8,
    # volume D=4, H=8, W=8
    N, C, G, D, H, W = 2, 4, 8, 4, 8, 8
    key = jax.random.PRNGKey(0)
    kx, kw, kb = jax.random.split(key, 3)

    x = jax.random.normal(kx, (N, C, D, H, W), dtype=jnp.float32)
    weight = 0.1 * jax.random.normal(kw, (G, C, 3, 3, 3), dtype=jnp.float32)
    bias = 0.1 * jax.random.normal(kb, (G,), dtype=jnp.float32)

    out = make_dense_forward(x, weight, bias)
    out = jax.block_until_ready(out)

    ref = make_dense_reference(x, weight, bias)
    assert out.shape == (N, C + G, D, H, W), out.shape
    assert jnp.allclose(out, ref, atol=1e-4, rtol=1e-4), \
        float(jnp.max(jnp.abs(out - ref)))

    print("KERNEL_OK")
</pallas_src>

<mosaic_0001>
module attributes {stable_mosaic.version = 11 : i64} {
  func.func @_make_dense_kernel(%arg0: i32, %arg1: i32, %arg2: memref<1x1x4x100xf32, #tpu.memory_space<vmem>>, %arg3: memref<1x1x4x100xf32, #tpu.memory_space<vmem>>, %arg4: memref<1x1x4x100xf32, #tpu.memory_space<vmem>>, %arg5: memref<3x72x4xf32, #tpu.memory_space<vmem>>, %arg6: memref<8x1xf32, #tpu.memory_space<vmem>>, %arg7: memref<1x12x1x8x8xf32, #tpu.memory_space<vmem>>) attributes {dimension_semantics = [#tpu.dimension_semantics<parallel>, #tpu.dimension_semantics<parallel>], iteration_bounds = array<i64: 2, 4>, scalar_prefetch = 0 : i64, scratch_operands = 0 : i64, tpu.core_type = #tpu.core_type<tc>, window_params = [{transform_indices = @transform_0, window_bounds = array<i64: 1, 1, 4, 100>}, {transform_indices = @transform_1, window_bounds = array<i64: 1, 1, 4, 100>}, {transform_indices = @transform_2, window_bounds = array<i64: 1, 1, 4, 100>}, {pipeline_mode = #tpu.pipeline_mode<synchronous>, transform_indices = @transform_3, window_bounds = array<i64: 3, 72, 4>}, {pipeline_mode = #tpu.pipeline_mode<synchronous>, transform_indices = @transform_4, window_bounds = array<i64: 8, 1>}, {transform_indices = @transform_5, window_bounds = array<i64: 1, 12, 1, 8, 8>}]} {
    %c0 = arith.constant 0 : index
    %c0_0 = arith.constant 0 : index
    %c0_1 = arith.constant 0 : index
    %c0_2 = arith.constant 0 : index
    %0 = vector.load %arg2[%c0, %c0_0, %c0_1, %c0_2] : memref<1x1x4x100xf32, #tpu.memory_space<vmem>>, vector<1x1x4x100xf32>
    %1 = vector.shape_cast %0 : vector<1x1x4x100xf32> to vector<4x100xf32>
    %c0_3 = arith.constant 0 : index
    %c0_4 = arith.constant 0 : index
    %c0_5 = arith.constant 0 : index
    %c0_6 = arith.constant 0 : index
    %2 = vector.load %arg3[%c0_3, %c0_4, %c0_5, %c0_6] : memref<1x1x4x100xf32, #tpu.memory_space<vmem>>, vector<1x1x4x100xf32>
    %3 = vector.shape_cast %2 : vector<1x1x4x100xf32> to vector<4x100xf32>
    %c0_7 = arith.constant 0 : index
    %c0_8 = arith.constant 0 : index
    %c0_9 = arith.constant 0 : index
    %c0_10 = arith.constant 0 : index
    %4 = vector.load %arg4[%c0_7, %c0_8, %c0_9, %c0_10] : memref<1x1x4x100xf32, #tpu.memory_space<vmem>>, vector<1x1x4x100xf32>
    %5 = vector.shape_cast %4 : vector<1x1x4x100xf32> to vector<4x100xf32>
    %c0_11 = arith.constant 0 : index
    %c0_12 = arith.constant 0 : index
    %c0_13 = arith.constant 0 : index
    %6 = vector.load %arg5[%c0_11, %c0_12, %c0_13] : memref<3x72x4xf32, #tpu.memory_space<vmem>>, vector<1x72x4xf32>
    %7 = vector.shape_cast %6 : vector<1x72x4xf32> to vector<72x4xf32>
    %cst = arith.constant dense<0.000000e+00> : vector<72x100xf32>
    %8 = tpu.matmul %7, %1, %cst {dimension_numbers = #tpu.dot_dimension_numbers<[1], [0], [0], [1], [0, 0, 1, 1], [], []>} : vector<72x4xf32>, vector<4x100xf32>, vector<72x100xf32> -> vector<72x100xf32>
    %c1 = arith.constant 1 : index
    %c0_14 = arith.constant 0 : index
    %c0_15 = arith.constant 0 : index
    %9 = vector.load %arg5[%c1, %c0_14, %c0_15] : memref<3x72x4xf32, #tpu.memory_space<vmem>>, vector<1x72x4xf32>
    %10 = vector.shape_cast %9 : vector<1x72x4xf32> to vector<72x4xf32>
    %cst_16 = arith.constant dense<0.000000e+00> : vector<72x100xf32>
    %11 = tpu.matmul %10, %3, %cst_16 {dimension_numbers = #tpu.dot_dimension_numbers<[1], [0], [0], [1], [0, 0, 1, 1], [], []>} : vector<72x4xf32>, vector<4x100xf32>, vector<72x100xf32> -> vector<72x100xf32>
    %12 = arith.addf %8, %11 : vector<72x100xf32>
    %c2 = arith.constant 2 : index
    %c0_17 = arith.constant 0 : index
    %c0_18 = arith.constant 0 : index
    %13 = vector.load %arg5[%c2, %c0_17, %c0_18] : memref<3x72x4xf32, #tpu.memory_space<vmem>>, vector<1x72x4xf32>
    %14 = vector.shape_cast %13 : vector<1x72x4xf32> to vector<72x4xf32>
    %cst_19 = arith.constant dense<0.000000e+00> : vector<72x100xf32>
    %15 = tpu.matmul %14, %5, %cst_19 {dimension_numbers = #tpu.dot_dimension_numbers<[1], [0], [0], [1], [0, 0, 1, 1], [], []>} : vector<72x4xf32>, vector<4x100xf32>, vector<72x100xf32> -> vector<72x100xf32>
    %16 = arith.addf %12, %15 : vector<72x100xf32>
    %cst_20 = arith.constant 0.000000e+00 : f32
    %17 = vector.broadcast %cst_20 : f32 to vector<8x78xf32>
    %18 = vector.extract_strided_slice %16 {offsets = [0, 0], sizes = [8, 78], strides = [1, 1]} : vector<72x100xf32> to vector<8x78xf32>
    %19 = arith.addf %17, %18 : vector<8x78xf32>
    %20 = vector.extract_strided_slice %16 {offsets = [8, 1], sizes = [8, 78], strides = [1, 1]} : vector<72x100xf32> to vector<8x78xf32>
    %21 = arith.addf %19, %20 : vector<8x78xf32>
    %22 = vector.extract_strided_slice %16 {offsets = [16, 2], sizes = [8, 78], strides = [1, 1]} : vector<72x100xf32> to vector<8x78xf32>
    %23 = arith.addf %21, %22 : vector<8x78xf32>
    %24 = vector.extract_strided_slice %16 {offsets = [24, 10], sizes = [8, 78], strides = [1, 1]} : vector<72x100xf32> to vector<8x78xf32>
    %25 = arith.addf %23, %24 : vector<8x78xf32>
    %26 = vector.extract_strided_slice %16 {offsets = [32, 11], sizes = [8, 78], strides = [1, 1]} : vector<72x100xf32> to vector<8x78xf32>
    %27 = arith.addf %25, %26 : vector<8x78xf32>
    %28 = vector.extract_strided_slice %16 {offsets = [40, 12], sizes = [8, 78], strides = [1, 1]} : vector<72x100xf32> to vector<8x78xf32>
    %29 = arith.addf %27, %28 : vector<8x78xf32>
    %30 = vector.extract_strided_slice %16 {offsets = [48, 20], sizes = [8, 78], strides = [1, 1]} : vector<72x100xf32> to vector<8x78xf32>
    %31 = arith.addf %29, %30 : vector<8x78xf32>
    %32 = vector.extract_strided_slice %16 {offsets = [56, 21], sizes = [8, 78], strides = [1, 1]} : vector<72x100xf32> to vector<8x78xf32>
    %33 = arith.addf %31, %32 : vector<8x78xf32>
    %34 = vector.extract_strided_slice %16 {offsets = [64, 22], sizes = [8, 78], strides = [1, 1]} : vector<72x100xf32> to vector<8x78xf32>
    %35 = arith.addf %33, %34 : vector<8x78xf32>
    %c0_21 = arith.constant 0 : index
    %c0_22 = arith.constant 0 : index
    %36 = vector.load %arg6[%c0_21, %c0_22] : memref<8x1xf32, #tpu.memory_space<vmem>>, vector<8x1xf32>
    %37 = vector.broadcast %36 : vector<8x1xf32> to vector<8x78xf32>
    %38 = arith.addf %35, %37 : vector<8x78xf32>
    %cst_23 = arith.constant 0.000000e+00 : f32
    %39 = vector.broadcast %cst_23 : f32 to vector<8x78xf32>
    %40 = arith.maximumf %38, %39 : vector<8x78xf32>
    %41 = vector.extract_strided_slice %3 {offsets = [0, 11], sizes = [4, 8], strides = [1, 1]} : vector<4x100xf32> to vector<4x8xf32>
    %c0_24 = arith.constant 0 : index
    %c0_25 = arith.constant 0 : index
    %c0_26 = arith.constant 0 : index
    %c0_27 = arith.constant 0 : index
    %c0_28 = arith.constant 0 : index
    %42 = vector.load %arg7[%c0_24, %c0_25, %c0_26, %c0_27, %c0_28] : memref<1x12x1x8x8xf32, #tpu.memory_space<vmem>>, vector<1x4x1x1x8xf32>
    %43 = vector.shape_cast %42 : vector<1x4x1x1x8xf32> to vector<4x8xf32>
    %44 = vector.shape_cast %41 : vector<4x8xf32> to vector<1x4x1x1x8xf32>
    tpu.vector_store %arg7[%c0_24, %c0_25, %c0_26, %c0_27, %c0_28], %44 {strides = array<i32>} : memref<1x12x1x8x8xf32, #tpu.memory_space<vmem>>, vector<1x4x1x1x8xf32>,
    %45 = vector.extract_strided_slice %40 {offsets = [0, 0], sizes = [8, 8], strides = [1, 1]} : vector<8x78xf32> to vector<8x8xf32>
    %c0_29 = arith.constant 0 : index
    %c4 = arith.constant 4 : index
    %c0_30 = arith.constant 0 : index
    %c0_31 = arith.constant 0 : index
    %c0_32 = arith.constant 0 : index
    %46 = vector.load %arg7[%c0_29, %c4, %c0_30, %c0_31, %c0_32] : memref<1x12x1x8x8xf32, #tpu.memory_space<vmem>>, vector<1x8x1x1x8xf32>
    %47 = vector.shape_cast %46 : vector<1x8x1x1x8xf32> to vector<8x8xf32>
    %48 = vector.shape_cast %45 : vector<8x8xf32> to vector<1x8x1x1x8xf32>
    tpu.vector_store %arg7[%c0_29, %c4, %c0_30, %c0_31, %c0_32], %48 {strides = array<i32>} : memref<1x12x1x8x8xf32, #tpu.memory_space<vmem>>, vector<1x8x1x1x8xf32>,
    %49 = vector.extract_strided_slice %3 {offsets = [0, 21], sizes = [4, 8], strides = [1, 1]} : vector<4x100xf32> to vector<4x8xf32>
    %c0_33 = arith.constant 0 : index
    %c0_34 = arith.constant 0 : index
    %c0_35 = arith.constant 0 : index
    %c1_36 = arith.constant 1 : index
    %c0_37 = arith.constant 0 : index
    %50 = vector.load %arg7[%c0_33, %c0_34, %c0_35, %c1_36, %c0_37] : memref<1x12x1x8x8xf32, #tpu.memory_space<vmem>>, vector<1x4x1x1x8xf32>
    %51 = vector.shape_cast %50 : vector<1x4x1x1x8xf32> to vector<4x8xf32>
    %52 = vector.shape_cast %49 : vector<4x8xf32> to vector<1x4x1x1x8xf32>
    tpu.vector_store %arg7[%c0_33, %c0_34, %c0_35, %c1_36, %c0_37], %52 {strides = array<i32>} : memref<1x12x1x8x8xf32, #tpu.memory_space<vmem>>, vector<1x4x1x1x8xf32>,
    %53 = vector.extract_strided_slice %40 {offsets = [0, 10], sizes = [8, 8], strides = [1, 1]} : vector<8x78xf32> to vector<8x8xf32>
    %c0_38 = arith.constant 0 : index
    %c4_39 = arith.constant 4 : index
    %c0_40 = arith.constant 0 : index
    %c1_41 = arith.constant 1 : index
    %c0_42 = arith.constant 0 : index
    %54 = vector.load %arg7[%c0_38, %c4_39, %c0_40, %c1_41, %c0_42] : memref<1x12x1x8x8xf32, #tpu.memory_space<vmem>>, vector<1x8x1x1x8xf32>
    %55 = vector.shape_cast %54 : vector<1x8x1x1x8xf32> to vector<8x8xf32>
    %56 = vector.shape_cast %53 : vector<8x8xf32> to vector<1x8x1x1x8xf32>
    tpu.vector_store %arg7[%c0_38, %c4_39, %c0_40, %c1_41, %c0_42], %56 {strides = array<i32>} : memref<1x12x1x8x8xf32, #tpu.memory_space<vmem>>, vector<1x8x1x1x8xf32>,
    %57 = vector.extract_strided_slice %3 {offsets = [0, 31], sizes = [4, 8], strides = [1, 1]} : vector<4x100xf32> to vector<4x8xf32>
    %c0_43 = arith.constant 0 : index
    %c0_44 = arith.constant 0 : index
    %c0_45 = arith.constant 0 : index
    %c2_46 = arith.constant 2 : index
    %c0_47 = arith.constant 0 : index
    %58 = vector.load %arg7[%c0_43, %c0_44, %c0_45, %c2_46, %c0_47] : memref<1x12x1x8x8xf32, #tpu.memory_space<vmem>>, vector<1x4x1x1x8xf32>
    %59 = vector.shape_cast %58 : vector<1x4x1x1x8xf32> to vector<4x8xf32>
    %60 = vector.shape_cast %57 : vector<4x8xf32> to vector<1x4x1x1x8xf32>
    tpu.vector_store %arg7[%c0_43, %c0_44, %c0_45, %c2_46, %c0_47], %60 {strides = array<i32>} : memref<1x12x1x8x8xf32, #tpu.memory_space<vmem>>, vector<1x4x1x1x8xf32>,
    %61 = vector.extract_strided_slice %40 {offsets = [0, 20], sizes = [8, 8], strides = [1, 1]} : vector<8x78xf32> to vector<8x8xf32>
    %c0_48 = arith.constant 0 : index
    %c4_49 = arith.constant 4 : index
    %c0_50 = arith.constant 0 : index
    %c2_51 = arith.constant 2 : index
    %c0_52 = arith.constant 0 : index
    %62 = vector.load %arg7[%c0_48, %c4_49, %c0_50, %c2_51, %c0_52] : memref<1x12x1x8x8xf32, #tpu.memory_space<vmem>>, vector<1x8x1x1x8xf32>
    %63 = vector.shape_cast %62 : vector<1x8x1x1x8xf32> to vector<8x8xf32>
    %64 = vector.shape_cast %61 : vector<8x8xf32> to vector<1x8x1x1x8xf32>
    tpu.vector_store %arg7[%c0_48, %c4_49, %c0_50, %c2_51, %c0_52], %64 {strides = array<i32>} : memref<1x12x1x8x8xf32, #tpu.memory_space<vmem>>, vector<1x8x1x1x8xf32>,
    %65 = vector.extract_strided_slice %3 {offsets = [0, 41], sizes = [4, 8], strides = [1, 1]} : vector<4x100xf32> to vector<4x8xf32>
    %c0_53 = arith.constant 0 : index
    %c0_54 = arith.constant 0 : index
    %c0_55 = arith.constant 0 : index
    %c3 = arith.constant 3 : index
    %c0_56 = arith.constant 0 : index
    %66 = vector.load %arg7[%c0_53, %c0_54, %c0_55, %c3, %c0_56] : memref<1x12x1x8x8xf32, #tpu.memory_space<vmem>>, vector<1x4x1x1x8xf32>
    %67 = vector.shape_cast %66 : vector<1x4x1x1x8xf32> to vector<4x8xf32>
    %68 = vector.shape_cast %65 : vector<4x8xf32> to vector<1x4x1x1x8xf32>
    tpu.vector_store %arg7[%c0_53, %c0_54, %c0_55, %c3, %c0_56], %68 {strides = array<i32>} : memref<1x12x1x8x8xf32, #tpu.memory_space<vmem>>, vector<1x4x1x1x8xf32>,
    %69 = vector.extract_strided_slice %40 {offsets = [0, 30], sizes = [8, 8], strides = [1, 1]} : vector<8x78xf32> to vector<8x8xf32>
    %c0_57 = arith.constant 0 : index
    %c4_58 = arith.constant 4 : index
    %c0_59 = arith.constant 0 : index
    %c3_60 = arith.constant 3 : index
    %c0_61 = arith.constant 0 : index
    %70 = vector.load %arg7[%c0_57, %c4_58, %c0_59, %c3_60, %c0_61] : memref<1x12x1x8x8xf32, #tpu.memory_space<vmem>>, vector<1x8x1x1x8xf32>
    %71 = vector.shape_cast %70 : vector<1x8x1x1x8xf32> to vector<8x8xf32>
    %72 = vector.shape_cast %69 : vector<8x8xf32> to vector<1x8x1x1x8xf32>
    tpu.vector_store %arg7[%c0_57, %c4_58, %c0_59, %c3_60, %c0_61], %72 {strides = array<i32>} : memref<1x12x1x8x8xf32, #tpu.memory_space<vmem>>, vector<1x8x1x1x8xf32>,
    %73 = vector.extract_strided_slice %3 {offsets = [0, 51], sizes = [4, 8], strides = [1, 1]} : vector<4x100xf32> to vector<4x8xf32>
    %c0_62 = arith.constant 0 : index
    %c0_63 = arith.constant 0 : index
    %c0_64 = arith.constant 0 : index
    %c4_65 = arith.constant 4 : index
    %c0_66 = arith.constant 0 : index
    %74 = vector.load %arg7[%c0_62, %c0_63, %c0_64, %c4_65, %c0_66] : memref<1x12x1x8x8xf32, #tpu.memory_space<vmem>>, vector<1x4x1x1x8xf32>
    %75 = vector.shape_cast %74 : vector<1x4x1x1x8xf32> to vector<4x8xf32>
    %76 = vector.shape_cast %73 : vector<4x8xf32> to vector<1x4x1x1x8xf32>
    tpu.vector_store %arg7[%c0_62, %c0_63, %c0_64, %c4_65, %c0_66], %76 {strides = array<i32>} : memref<1x12x1x8x8xf32, #tpu.memory_space<vmem>>, vector<1x4x1x1x8xf32>,
    %77 = vector.extract_strided_slice %40 {offsets = [0, 40], sizes = [8, 8], strides = [1, 1]} : vector<8x78xf32> to vector<8x8xf32>
    %c0_67 = arith.constant 0 : index
    %c4_68 = arith.constant 4 : index
    %c0_69 = arith.constant 0 : index
    %c4_70 = arith.constant 4 : index
    %c0_71 = arith.constant 0 : index
    %78 = vector.load %arg7[%c0_67, %c4_68, %c0_69, %c4_70, %c0_71] : memref<1x12x1x8x8xf32, #tpu.memory_space<vmem>>, vector<1x8x1x1x8xf32>
    %79 = vector.shape_cast %78 : vector<1x8x1x1x8xf32> to vector<8x8xf32>
    %80 = vector.shape_cast %77 : vector<8x8xf32> to vector<1x8x1x1x8xf32>
    tpu.vector_store %arg7[%c0_67, %c4_68, %c0_69, %c4_70, %c0_71], %80 {strides = array<i32>} : memref<1x12x1x8x8xf32, #tpu.memory_space<vmem>>, vector<1x8x1x1x8xf32>,
    %81 = vector.extract_strided_slice %3 {offsets = [0, 61], sizes = [4, 8], strides = [1, 1]} : vector<4x100xf32> to vector<4x8xf32>
    %c0_72 = arith.constant 0 : index
    %c0_73 = arith.constant 0 : index
    %c0_74 = arith.constant 0 : index
    %c5 = arith.constant 5 : index
    %c0_75 = arith.constant 0 : index
    %82 = vector.load %arg7[%c0_72, %c0_73, %c0_74, %c5, %c0_75] : memref<1x12x1x8x8xf32, #tpu.memory_space<vmem>>, vector<1x4x1x1x8xf32>
    %83 = vector.shape_cast %82 : vector<1x4x1x1x8xf32> to vector<4x8xf32>
    %84 = vector.shape_cast %81 : vector<4x8xf32> to vector<1x4x1x1x8xf32>
    tpu.vector_store %arg7[%c0_72, %c0_73, %c0_74, %c5, %c0_75], %84 {strides = array<i32>} : memref<1x12x1x8x8xf32, #tpu.memory_space<vmem>>, vector<1x4x1x1x8xf32>,
    %85 = vector.extract_strided_slice %40 {offsets = [0, 50], sizes = [8, 8], strides = [1, 1]} : vector<8x78xf32> to vector<8x8xf32>
    %c0_76 = arith.constant 0 : index
    %c4_77 = arith.constant 4 : index
    %c0_78 = arith.constant 0 : index
    %c5_79 = arith.constant 5 : index
    %c0_80 = arith.constant 0 : index
    %86 = vector.load %arg7[%c0_76, %c4_77, %c0_78, %c5_79, %c0_80] : memref<1x12x1x8x8xf32, #tpu.memory_space<vmem>>, vector<1x8x1x1x8xf32>
    %87 = vector.shape_cast %86 : vector<1x8x1x1x8xf32> to vector<8x8xf32>
    %88 = vector.shape_cast %85 : vector<8x8xf32> to vector<1x8x1x1x8xf32>
    tpu.vector_store %arg7[%c0_76, %c4_77, %c0_78, %c5_79, %c0_80], %88 {strides = array<i32>} : memref<1x12x1x8x8xf32, #tpu.memory_space<vmem>>, vector<1x8x1x1x8xf32>,
    %89 = vector.extract_strided_slice %3 {offsets = [0, 71], sizes = [4, 8], strides = [1, 1]} : vector<4x100xf32> to vector<4x8xf32>
    %c0_81 = arith.constant 0 : index
    %c0_82 = arith.constant 0 : index
    %c0_83 = arith.constant 0 : index
    %c6 = arith.constant 6 : index
    %c0_84 = arith.constant 0 : index
    %90 = vector.load %arg7[%c0_81, %c0_82, %c0_83, %c6, %c0_84] : memref<1x12x1x8x8xf32, #tpu.memory_space<vmem>>, vector<1x4x1x1x8xf32>
    %91 = vector.shape_cast %90 : vector<1x4x1x1x8xf32> to vector<4x8xf32>
    %92 = vector.shape_cast %89 : vector<4x8xf32> to vector<1x4x1x1x8xf32>
    tpu.vector_store %arg7[%c0_81, %c0_82, %c0_83, %c6, %c0_84], %92 {strides = array<i32>} : memref<1x12x1x8x8xf32, #tpu.memory_space<vmem>>, vector<1x4x1x1x8xf32>,
    %93 = vector.extract_strided_slice %40 {offsets = [0, 60], sizes = [8, 8], strides = [1, 1]} : vector<8x78xf32> to vector<8x8xf32>
    %c0_85 = arith.constant 0 : index
    %c4_86 = arith.constant 4 : index
    %c0_87 = arith.constant 0 : index
    %c6_88 = arith.constant 6 : index
    %c0_89 = arith.constant 0 : index
    %94 = vector.load %arg7[%c0_85, %c4_86, %c0_87, %c6_88, %c0_89] : memref<1x12x1x8x8xf32, #tpu.memory_space<vmem>>, vector<1x8x1x1x8xf32>
    %95 = vector.shape_cast %94 : vector<1x8x1x1x8xf32> to vector<8x8xf32>
    %96 = vector.shape_cast %93 : vector<8x8xf32> to vector<1x8x1x1x8xf32>
    tpu.vector_store %arg7[%c0_85, %c4_86, %c0_87, %c6_88, %c0_89], %96 {strides = array<i32>} : memref<1x12x1x8x8xf32, #tpu.memory_space<vmem>>, vector<1x8x1x1x8xf32>,
    %97 = vector.extract_strided_slice %3 {offsets = [0, 81], sizes = [4, 8], strides = [1, 1]} : vector<4x100xf32> to vector<4x8xf32>
    %c0_90 = arith.constant 0 : index
    %c0_91 = arith.constant 0 : index
    %c0_92 = arith.constant 0 : index
    %c7 = arith.constant 7 : index
    %c0_93 = arith.constant 0 : index
    %98 = vector.load %arg7[%c0_90, %c0_91, %c0_92, %c7, %c0_93] : memref<1x12x1x8x8xf32, #tpu.memory_space<vmem>>, vector<1x4x1x1x8xf32>
    %99 = vector.shape_cast %98 : vector<1x4x1x1x8xf32> to vector<4x8xf32>
    %100 = vector.shape_cast %97 : vector<4x8xf32> to vector<1x4x1x1x8xf32>
    tpu.vector_store %arg7[%c0_90, %c0_91, %c0_92, %c7, %c0_93], %100 {strides = array<i32>} : memref<1x12x1x8x8xf32, #tpu.memory_space<vmem>>, vector<1x4x1x1x8xf32>,
    %101 = vector.extract_strided_slice %40 {offsets = [0, 70], sizes = [8, 8], strides = [1, 1]} : vector<8x78xf32> to vector<8x8xf32>
    %c0_94 = arith.constant 0 : index
    %c4_95 = arith.constant 4 : index
    %c0_96 = arith.constant 0 : index
    %c7_97 = arith.constant 7 : index
    %c0_98 = arith.constant 0 : index
    %102 = vector.load %arg7[%c0_94, %c4_95, %c0_96, %c7_97, %c0_98] : memref<1x12x1x8x8xf32, #tpu.memory_space<vmem>>, vector<1x8x1x1x8xf32>
    %103 = vector.shape_cast %102 : vector<1x8x1x1x8xf32> to vector<8x8xf32>
    %104 = vector.shape_cast %101 : vector<8x8xf32> to vector<1x8x1x1x8xf32>
    tpu.vector_store %arg7[%c0_94, %c4_95, %c0_96, %c7_97, %c0_98], %104 {strides = array<i32>} : memref<1x12x1x8x8xf32, #tpu.memory_space<vmem>>, vector<1x8x1x1x8xf32>,
    return
  }
  func.func @transform_0(%arg0: i32, %arg1: i32) -> (i32, i32, i32, i32) {
    %c0_i32 = arith.constant 0 : i32
    %c0_i32_0 = arith.constant 0 : i32
    %c0_i32_1 = arith.constant 0 : i32
    return %arg0, %arg1, %c0_i32, %c0_i32_0 : i32, i32, i32, i32
  }
  func.func @transform_1(%arg0: i32, %arg1: i32) -> (i32, i32, i32, i32) {
    %c1_i32 = arith.constant 1 : i32
    %0 = arith.addi %arg1, %c1_i32 : i32
    %c0_i32 = arith.constant 0 : i32
    %c0_i32_0 = arith.constant 0 : i32
    %c0_i32_1 = arith.constant 0 : i32
    return %arg0, %0, %c0_i32, %c0_i32_0 : i32, i32, i32, i32
  }
  func.func @transform_2(%arg0: i32, %arg1: i32) -> (i32, i32, i32, i32) {
    %c2_i32 = arith.constant 2 : i32
    %0 = arith.addi %arg1, %c2_i32 : i32
    %c0_i32 = arith.constant 0 : i32
    %c0_i32_0 = arith.constant 0 : i32
    %c0_i32_1 = arith.constant 0 : i32
    return %arg0, %0, %c0_i32, %c0_i32_0 : i32, i32, i32, i32
  }
  func.func @transform_3(%arg0: i32, %arg1: i32) -> (i32, i32, i32) {
    %c0_i32 = arith.constant 0 : i32
    %c0_i32_0 = arith.constant 0 : i32
    %c0_i32_1 = arith.constant 0 : i32
    %c0_i32_2 = arith.constant 0 : i32
    return %c0_i32, %c0_i32_0, %c0_i32_1 : i32, i32, i32
  }
  func.func @transform_4(%arg0: i32, %arg1: i32) -> (i32, i32) {
    %c0_i32 = arith.constant 0 : i32
    %c0_i32_0 = arith.constant 0 : i32
    %c0_i32_1 = arith.constant 0 : i32
    return %c0_i32, %c0_i32_0 : i32, i32
  }
  func.func @transform_5(%arg0: i32, %arg1: i32) -> (i32, i32, i32, i32, i32) {
    %c0_i32 = arith.constant 0 : i32
    %c0_i32_0 = arith.constant 0 : i32
    %c0_i32_1 = arith.constant 0 : i32
    %c0_i32_2 = arith.constant 0 : i32
    return %arg0, %c0_i32, %arg1, %c0_i32_0, %c0_i32_1 : i32, i32, i32, i32, i32
  }
}

</mosaic_0001>

<llo_original>
// kernel: tpu_custom_call.1
$region0: #{tpu_custom_call.1}
  #allocation0 [shape = 'u32[]', space=smem, size = 0x4, offset = 0x4, fixed_abs, tag = 'smem constant byte address 0x4 - core index']
  #allocation1 [shape = 'u32[144,128]{1,0:T(1,128)}', space=vmem, size = 0x12000, scoped, tag = 'internal scratch']
  %s0 = inlined_call_operand.vmem [shape: f32[2,6,4,100], index: 0, kind: input, shape index: {}]
  %s1 = inlined_call_operand.vmem [shape: f32[2,6,4,100], index: 1, kind: input, shape index: {}]
  %s2 = inlined_call_operand.vmem [shape: f32[2,6,4,100], index: 2, kind: input, shape index: {}]
  %s3 = inlined_call_operand.vmem [shape: f32[3,72,4], index: 3, kind: input, shape index: {}]
  %s4 = inlined_call_operand.vmem [shape: f32[8,1], index: 4, kind: input, shape index: {}]
  %s5 = inlined_call_operand.vmem [shape: f32[2,12,4,8,8], index: 5, kind: output, shape index: {}]
  %s6 = sld [smem:[#allocation0]]
  $region87: #{tpu_custom_call.1} parent=0
    _
  %s8 = ssub.s32 1, %s6
  %s9 = scalar_select 0, %s8, %s6
  $region1: #{tpu_custom_call.1} parent=0
    #allocation2 [shape = 'u8[98304]{0}', space=vmem, size = 0x18000, scoped, tag = 'output window, operand 0']
    loop: start=0, step=1, limit=10
    $region2: #{tpu_custom_call.1} parent=1 // loop_pre_header
      _
    $region3: #{tpu_custom_call.1} parent=1 // loop_header
      %s11 = sphi 0, %s15
      %p12 = scmp.ge.s32.totalorder %s11, 10
      %s18 = sphi 0, %s30
      %s19 = sphi 0, %s26
      %s20 = sphi 0, %s18
      %s21 = sphi 0, %s19
      %s22 = sphi 0, %s20
      %s23 = sphi 0, %s21
      %s35 = sphi 0, %s37
      %s38 = sphi 0, %s35
      %s39 = sphi 0, %s38
      %s55 = sphi 0, %s39
      %s65 = sphi 0, %s67
      %s68 = sphi 0, %s65
      %s69 = sphi 0, %s68
      %s85 = sphi 0, %s69
      %s95 = sphi 0, %s97
      %s98 = sphi 0, %s95
      %s99 = sphi 0, %s98
      %s115 = sphi 0, %s99
      %s119 = sphi 0, %s119
      %s121 = sphi 0, %s119
      %s122 = sphi 0, %s121
      %s136 = sphi 0, %s122
      %s140 = sphi 0, %s140
      %s142 = sphi 0, %s140
      %s143 = sphi 0, %s142
      %s157 = sphi 0, %s143
      %s165 = sphi 0, %s167
      %s168 = sphi 0, %s165
      %s169 = sphi 0, %s168
      %s185 = sphi 0, %s169
    $region4: #{tpu_custom_call.1} parent=1 // loop_header_branch
      %14 = sbr.rel (%p12) target = $region8
    $region5: #{tpu_custom_call.1} parent=1 // loop_body
      %s16 = ssub.s32 %s11, 1
      %s17 = ssub.s32 %s11, 2
      %s24 = sadd.s32 1, %s19
      %p25 = scmp.ge.s32.totalorder %s24, 4
      %s26 = scalar_select %p25, 0, %s24
      %s27 = sadd.s32 1, %s18
      %s28 = scalar_select %p25, %s27, %s18
      %p29 = scmp.ge.s32.totalorder %s28, 2
      %s30 = scalar_select %p29, 0, %s28
      %s31 = ssub.s32 %s18, %s30
      %s32 = ssub.s32 %s19, %s26
      %s33 = sor.u32 %s31, %s32
      %p34 = scmp.eq.s32.totalorder %s33, 0
      %s36 = sadd.s32 %s35, 1
      %s37 = scalar_select %p34, %s35, %s36
      %p40 = pneg %p34
      %p41 = scmp.eq.s32.totalorder %s11, 7
      %p42 = por %p40, %p41
      %p43 = scmp.ne.s32.totalorder %s35, %s38
      %p44 = scmp.eq.s32.totalorder %s11, 0
      %p45 = por %p43, %p44
      %p46 = scmp.ne.s32.totalorder %s35, %s38
      %p47 = scmp.eq.s32.totalorder %s16, 7
      %p48 = por %p46, %p47
      %p49 = scmp.ne.s32.totalorder %s38, %s39
      %p50 = scmp.eq.s32.totalorder %s16, 0
      %p51 = por %p49, %p50
      %p52 = scmp.ne.s32.totalorder %s38, %s39
      %p53 = scmp.eq.s32.totalorder %s17, 7
      %p54 = por %p52, %p53
      %p56 = scmp.ne.s32.totalorder %s39, %s55
      %p57 = scmp.eq.s32.totalorder %s17, 0
      %p58 = por %p56, %p57
      %s59 = sadd.s32 %s19, 1
      %s60 = sadd.s32 %s26, 1
      %s61 = ssub.s32 %s18, %s30
      %s62 = ssub.s32 %s59, %s60
      %s63 = sor.u32 %s61, %s62
      %p64 = scmp.eq.s32.totalorder %s63, 0
      %s66 = sadd.s32 %s65, 1
      %s67 = scalar_select %p64, %s65, %s66
      %p70 = pneg %p64
      %p71 = scmp.eq.s32.totalorder %s11, 7
      %p72 = por %p70, %p71
      %p73 = scmp.ne.s32.totalorder %s65, %s68
      %p74 = scmp.eq.s32.totalorder %s11, 0
      %p75 = por %p73, %p74
      %p76 = scmp.ne.s32.totalorder %s65, %s68
      %p77 = scmp.eq.s32.totalorder %s16, 7
      %p78 = por %p76, %p77
      %p79 = scmp.ne.s32.totalorder %s68, %s69
      %p80 = scmp.eq.s32.totalorder %s16, 0
      %p81 = por %p79, %p80
      %p82 = scmp.ne.s32.totalorder %s68, %s69
      %p83 = scmp.eq.s32.totalorder %s17, 7
      %p84 = por %p82, %p83
      %p86 = scmp.ne.s32.totalorder %s69, %s85
      %p87 = scmp.eq.s32.totalorder %s17, 0
      %p88 = por %p86, %p87
      %s89 = sadd.s32 %s19, 2
      %s90 = sadd.s32 %s26, 2
      %s91 = ssub.s32 %s18, %s30
      %s92 = ssub.s32 %s89, %s90
      %s93 = sor.u32 %s91, %s92
      %p94 = scmp.eq.s32.totalorder %s93, 0
      %s96 = sadd.s32 %s95, 1
      %s97 = scalar_select %p94, %s95, %s96
      %p100 = pneg %p94
      %p101 = scmp.eq.s32.totalorder %s11, 7
      %p102 = por %p100, %p101
      %p103 = scmp.ne.s32.totalorder %s95, %s98
      %p104 = scmp.eq.s32.totalorder %s11, 0
      %p105 = por %p103, %p104
      %p106 = scmp.ne.s32.totalorder %s95, %s98
      %p107 = scmp.eq.s32.totalorder %s16, 7
      %p108 = por %p106, %p107
      %p109 = scmp.ne.s32.totalorder %s98, %s99
      %p110 = scmp.eq.s32.totalorder %s16, 0
      %p111 = por %p109, %p110
      %p112 = scmp.ne.s32.totalorder %s98, %s99
      %p113 = scmp.eq.s32.totalorder %s17, 7
      %p114 = por %p112, %p113
      %p116 = scmp.ne.s32.totalorder %s99, %s115
      %p117 = scmp.eq.s32.totalorder %s17, 0
      %p118 = por %p116, %p117
      %s120 = sadd.s32 %s119, 1
      %p123 = scmp.eq.s32.totalorder %s11, 7
      %p124 = scmp.ne.s32.totalorder %s119, %s121
      %p125 = scmp.eq.s32.totalorder %s11, 0
      %p126 = por %p124, %p125
      %p127 = scmp.ne.s32.totalorder %s119, %s121
      %p128 = scmp.eq.s32.totalorder %s16, 7
      %p129 = por %p127, %p128
      %p130 = scmp.ne.s32.totalorder %s121, %s122
      %p131 = scmp.eq.s32.totalorder %s16, 0
      %p132 = por %p130, %p131
      %p133 = scmp.ne.s32.totalorder %s121, %s122
      %p134 = scmp.eq.s32.totalorder %s17, 7
      %p135 = por %p133, %p134
      %p137 = scmp.ne.s32.totalorder %s122, %s136
      %p138 = scmp.eq.s32.totalorder %s17, 0
      %p139 = por %p137, %p138
      %s141 = sadd.s32 %s140, 1
      %p144 = scmp.eq.s32.totalorder %s11, 7
      %p145 = scmp.ne.s32.totalorder %s140, %s142
      %p146 = scmp.eq.s32.totalorder %s11, 0
      %p147 = por %p145, %p146
      %p148 = scmp.ne.s32.totalorder %s140, %s142
      %p149 = scmp.eq.s32.totalorder %s16, 7
      %p150 = por %p148, %p149
      %p151 = scmp.ne.s32.totalorder %s142, %s143
      %p152 = scmp.eq.s32.totalorder %s16, 0
      %p153 = por %p151, %p152
      %p154 = scmp.ne.s32.totalorder %s142, %s143
      %p155 = scmp.eq.s32.totalorder %s17, 7
      %p156 = por %p154, %p155
      %p158 = scmp.ne.s32.totalorder %s143, %s157
      %p159 = scmp.eq.s32.totalorder %s17, 0
      %p160 = por %p158, %p159
      %s161 = ssub.s32 %s18, %s30
      %s162 = ssub.s32 %s19, %s26
      %s163 = sor.u32 %s161, %s162
      %p164 = scmp.eq.s32.totalorder %s163, 0
      %s166 = sadd.s32 %s165, 1
      %s167 = scalar_select %p164, %s165, %s166
      %p170 = pneg %p164
      %p171 = scmp.eq.s32.totalorder %s11, 7
      %p172 = por %p170, %p171
      %p173 = scmp.ne.s32.totalorder %s165, %s168
      %p174 = scmp.eq.s32.totalorder %s11, 0
      %p175 = por %p173, %p174
      %p176 = scmp.ne.s32.totalorder %s165, %s168
      %p177 = scmp.eq.s32.totalorder %s16, 7
      %p178 = por %p176, %p177
      %p179 = scmp.ne.s32.totalorder %s168, %s169
      %p180 = scmp.eq.s32.totalorder %s16, 0
      %p181 = por %p179, %p180
      %p182 = scmp.ne.s32.totalorder %s168, %s169
      %p183 = scmp.eq.s32.totalorder %s17, 7
      %p184 = por %p182, %p183
      %p186 = scmp.ne.s32.totalorder %s169, %s185
      %p187 = scmp.eq.s32.totalorder %s17, 0
      %p188 = por %p186, %p187
      %p189 = scmp.le.s32.totalorder 1, %s11
      %p190 = scmp.lt.s32.totalorder %s11, 9
      %p191 = pnand %p189, %p190
      %p192 = pneg %p191
      // Predicated region
      $region9: #{tpu_custom_call.1} parent=5 // pred_check
        _
      $region10: #{tpu_custom_call.1} parent=5 // pred_check_branch
        %194 = sbr.rel (%p191) target = $region12
      $region11: #{tpu_custom_call.1} parent=5 // pred_region
        %s195 = ssub.s32 %s11, 1
        // Predicated region
        $region13: #{tpu_custom_call.1} parent=11 // pred_check
          %p196 = pneg %p132
        $region14: #{tpu_custom_call.1} parent=11 // pred_check_branch
          %198 = sbr.rel (%p196) target = $region16
        $region15: #{tpu_custom_call.1} parent=11 // pred_region
          _
        $region16: #{tpu_custom_call.1} parent=11 // pred_fallthru
          _
        // Predicated region
        $region17: #{tpu_custom_call.1} parent=11 // pred_check
          %p199 = pneg %p153
        $region18: #{tpu_custom_call.1} parent=11 // pred_check_branch
          %201 = sbr.rel (%p199) target = $region20
        $region19: #{tpu_custom_call.1} parent=11 // pred_region
          _
        $region20: #{tpu_custom_call.1} parent=11 // pred_fallthru
          _
      $region12: #{tpu_custom_call.1} parent=5 // pred_fallthru
        _
      %p202 = scmp.lt.s32.totalorder %s11, 8
      // Predicated region
      $region21: #{tpu_custom_call.1} parent=5 // pred_check
        %p203 = pneg %p202
      $region22: #{tpu_custom_call.1} parent=5 // pred_check_branch
        %205 = sbr.rel (%p203) target = $region24
      $region23: #{tpu_custom_call.1} parent=5 // pred_region
        // Predicated region
        $region25: #{tpu_custom_call.1} parent=23 // pred_check
          %p206 = pneg %p45
        $region26: #{tpu_custom_call.1} parent=23 // pred_check_branch
          %208 = sbr.rel (%p206) target = $region28
        $region27: #{tpu_custom_call.1} parent=23 // pred_region
          %p209 = scmp.lt.s32.totalorder %s18, 1
          %s210 = scalar_select %p209, %s18, 1
          %p211 = scmp.lt.s32.totalorder %s19, 5
          %s212 = scalar_select %p211, %s19, 5
          %s213 = smul.addr %s210, 6
          %s214 = sadd.s32 %s212, %s213
          %s215 = smul.addr %s214, 4
          %s216 = scalar_lea.vmem %s0, %s215
        $region28: #{tpu_custom_call.1} parent=23 // pred_fallthru
          _
        // Predicated region
        $region29: #{tpu_custom_call.1} parent=23 // pred_check
          %p217 = pneg %p75
        $region30: #{tpu_custom_call.1} parent=23 // pred_check_branch
          %219 = sbr.rel (%p217) target = $region32
        $region31: #{tpu_custom_call.1} parent=23 // pred_region
          %s220 = sadd.s32 %s19, 1
          %p221 = scmp.lt.s32.totalorder %s18, 1
          %s222 = scalar_select %p221, %s18, 1
          %p223 = scmp.lt.s32.totalorder %s220, 5
          %s224 = scalar_select %p223, %s220, 5
          %s225 = smul.addr %s222, 6
          %s226 = sadd.s32 %s224, %s225
          %s227 = smul.addr %s226, 4
          %s228 = scalar_lea.vmem %s1, %s227
          %s229 = sadd.s32 %s19, 1
        $region32: #{tpu_custom_call.1} parent=23 // pred_fallthru
          _
        // Predicated region
        $region33: #{tpu_custom_call.1} parent=23 // pred_check
          %p230 = pneg %p105
        $region34: #{tpu_custom_call.1} parent=23 // pred_check_branch
          %232 = sbr.rel (%p230) target = $region36
        $region35: #{tpu_custom_call.1} parent=23 // pred_region
          %s233 = sadd.s32 %s19, 2
          %p234 = scmp.lt.s32.totalorder %s18, 1
          %s235 = scalar_select %p234, %s18, 1
          %p236 = scmp.lt.s32.totalorder %s233, 5
          %s237 = scalar_select %p236, %s233, 5
          %s238 = smul.addr %s235, 6
          %s239 = sadd.s32 %s237, %s238
          %s240 = smul.addr %s239, 4
          %s241 = scalar_lea.vmem %s2, %s240
          %s242 = sadd.s32 %s19, 2
        $region36: #{tpu_custom_call.1} parent=23 // pred_fallthru
          _
      $region24: #{tpu_custom_call.1} parent=5 // pred_fallthru
        _
      %p243 = scmp.le.s32.totalorder 1, %s11
      %p244 = scmp.lt.s32.totalorder %s11, 9
      %p245 = pnand %p243, %p244
      %p246 = pneg %p245
      // Predicated region
      $region37: #{tpu_custom_call.1} parent=5 // pred_check
        _
      $region38: #{tpu_custom_call.1} parent=5 // pred_check_branch
        %248 = sbr.rel (%p245) target = $region40
      $region39: #{tpu_custom_call.1} parent=5 // pred_region
        %s249 = ssub.s32 %s11, 1
        %p250 = scmp.lt.s32.totalorder %s20, 1
        %s251 = scalar_select %p250, %s20, 1
        %p252 = scmp.lt.s32.totalorder %s21, 5
        %s253 = scalar_select %p252, %s21, 5
        %s254 = smul.addr %s251, 6
        %s255 = sadd.s32 %s253, %s254
        %s256 = smul.addr %s255, 4
        %s257 = scalar_lea.vmem %s0, %s256
        %p258 = pneg %p51
        %p259 = pneg %p48
        %s260 = sadd.s32 %s21, 1
        %p261 = scmp.lt.s32.totalorder %s20, 1
        %s262 = scalar_select %p261, %s20, 1
        %p263 = scmp.lt.s32.totalorder %s260, 5
        %s264 = scalar_select %p263, %s260, 5
        %s265 = smul.addr %s262, 6
        %s266 = sadd.s32 %s264, %s265
        %s267 = smul.addr %s266, 4
        %s268 = scalar_lea.vmem %s1, %s267
        %p269 = pneg %p81
        %p270 = pneg %p78
        %s271 = sadd.s32 %s21, 2
        %p272 = scmp.lt.s32.totalorder %s20, 1
        %s273 = scalar_select %p272, %s20, 1
        %p274 = scmp.lt.s32.totalorder %s271, 5
        %s275 = scalar_select %p274, %s271, 5
        %s276 = smul.addr %s273, 6
        %s277 = sadd.s32 %s275, %s276
        %s278 = smul.addr %s277, 4
        %s279 = scalar_lea.vmem %s2, %s278
        %p280 = pneg %p111
        %p281 = pneg %p108
        %p282 = pneg %p132
        %p283 = pneg %p129
        %p284 = pneg %p153
        %p285 = pneg %p150
        %p286 = pneg %p181
        %p287 = pneg %p178
        %s288 = sand.u32 %s168, 1
        %s289 = sand.u32 %s168, 1
        %s290 = smul.addr %s289, 96
        %s291 = scalar_lea.vmem [#allocation2], %s290
        %p292 = scmp.lt.s32.totalorder %s20, 1
        %s293 = scalar_select %p292, %s20, 1
        %p294 = scmp.lt.s32.totalorder %s21, 5
        %s295 = scalar_select %p294, %s21, 5
        %s296 = smul.addr %s293, 6
        %s297 = sadd.s32 %s295, %s296
        %s298 = smul.addr %s297, 4
        %s299 = scalar_lea.vmem %s0, %s298
        %s300 = sadd.s32 %s21, 1
        %p301 = scmp.lt.s32.totalorder %s20, 1
        %s302 = scalar_select %p301, %s20, 1
        %p303 = scmp.lt.s32.totalorder %s300, 5
        %s304 = scalar_select %p303, %s300, 5
        %s305 = smul.addr %s302, 6
        %s306 = sadd.s32 %s304, %s305
        %s307 = smul.addr %s306, 4
        %s308 = scalar_lea.vmem %s1, %s307
        %s309 = sadd.s32 %s21, 1
        %s310 = sadd.s32 %s21, 2
        %p311 = scmp.lt.s32.totalorder %s20, 1
        %s312 = scalar_select %p311, %s20, 1
        %p313 = scmp.lt.s32.totalorder %s310, 5
        %s314 = scalar_select %p313, %s310, 5
        %s315 = smul.addr %s312, 6
        %s316 = sadd.s32 %s314, %s315
        %s317 = smul.addr %s316, 4
        %s318 = scalar_lea.vmem %s2, %s317
        %s319 = sadd.s32 %s21, 2
        %v320 = vld [vmem:[%s299] sm:$0xf]
        %v321 = vld [vmem:[%s308] sm:$0xf]
        %v322 = vld [vmem:[%s318] sm:$0xf]
        %v323 = vld [vmem:[%s3] sm:$0xff]
        %v324 = vld [vmem:[%s3 + $0x8] sm:$0xff]
        %v325 = vld [vmem:[%s3 + $0x10] sm:$0xff]
        %v326 = vld [vmem:[%s3 + $0x18] sm:$0xff]
        %v327 = vld [vmem:[%s3 + $0x20] sm:$0xff]
        %v328 = vld [vmem:[%s3 + $0x28] sm:$0xff]
        %v329 = vld [vmem:[%s3 + $0x30] sm:$0xff]
        %v330 = vld [vmem:[%s3 + $0x38] sm:$0xff]
        %v331 = vld [vmem:[%s3 + $0x40] sm:$0xff]
        %s332 = scalar_lea.vmem %s3, 72
        %v333 = vld [vmem:[%s332] sm:$0xff]
        %v334 = vld [vmem:[%s332 + $0x8] sm:$0xff]
        %v335 = vld [vmem:[%s332 + $0x10] sm:$0xff]
        %v336 = vld [vmem:[%s332 + $0x18] sm:$0xff]
        %v337 = vld [vmem:[%s332 + $0x20] sm:$0xff]
        %v338 = vld [vmem:[%s332 + $0x28] sm:$0xff]
        %v339 = vld [vmem:[%s332 + $0x30] sm:$0xff]
        %v340 = vld [vmem:[%s332 + $0x38] sm:$0xff]
        %v341 = vld [vmem:[%s332 + $0x40] sm:$0xff]
        %vm342 = vcmask 31744
        %v344 = vsel %vm342, %v333, 0
        %v347 = vsel %vm342, %v334, 0
        %v350 = vsel %vm342, %v335, 0
        %v353 = vsel %vm342, %v336, 0
        %v356 = vsel %vm342, %v337, 0
        %v359 = vsel %vm342, %v338, 0
        %v362 = vsel %vm342, %v339, 0
        %v365 = vsel %vm342, %v340, 0
        %v368 = vsel %vm342, %v341, 0
        %vm370 = vcmask 1043456
        %v372 = vsel %vm370, %v321, 0
        %374 = vmatprep.subr.mxu0 0.0
        %375 = vmatpush1.msra.mxu0 0.0
        %376 = vmatprep.subr.mxu0 0.0
        %377 = vmatpush1.msra.mxu0 0.0
        %378 = vmatprep.subr.mxu0 0.0
        %379 = vmatpush1.msra.mxu0 0.0
        %380 = vmatprep.subr.mxu0 0.0
        %381 = vmatpush1.msra.mxu0 0.0
        %382 = vmatprep.subr.mxu0 0.0
        %383 = vmatpush1.msra.mxu0 0.0
        %384 = vmatprep.subr.mxu0 0.0
        %385 = vmatpush1.msra.mxu0 0.0
        %386 = vmatprep.subr.mxu0 0.0
        %387 = vmatpush1.msra.mxu0 0.0
        %388 = vmatprep.subr.mxu0 0.0
        %389 = vmatpush1.msra.mxu0 0.0
        %390 = vmatprep.subr.mxu0 0.0
        %391 = vmatpush1.msra.mxu0 0.0
        %392 = vmatprep.subr.mxu0 0.0
        %393 = vmatpush1.msra.mxu0 0.0
        %394 = vmatprep.subr.mxu0 0.0
        %395 = vmatpush1.msra.mxu0 0.0
        %396 = vmatprep.subr.mxu0 0.0
        %397 = vmatpush1.msra.mxu0 0.0
        %398 = vmatprep.subr.mxu0 0.0
        %399 = vmatpush1.msra.mxu0 0.0
        %400 = vmatprep.subr.mxu0 0.0
        %401 = vmatpush1.msra.mxu0 0.0
        %402 = vmatprep.subr.mxu0 0.0
        %403 = vmatpush1.msra.mxu0 0.0
        %404 = vmatprep.subr.mxu0 0.0
        %405 = vmatpush1.msra.mxu0 %v372
        %406 = vmatprep.subr.mxu0 0.0
        %407 = vmatpush2.msra.mxu0 0.0
        %408 = vmatprep.subr.mxu0 0.0
        %409 = vmatpush2.msra.mxu0 0.0
        %410 = vmatprep.subr.mxu0 0.0
        %411 = vmatpush2.msra.mxu0 0.0
        %412 = vmatprep.subr.mxu0 0.0
        %413 = vmatpush2.msra.mxu0 0.0
        %414 = vmatprep.subr.mxu0 0.0
        %415 = vmatpush2.msra.mxu0 0.0
        %416 = vmatprep.subr.mxu0 0.0
        %417 = vmatpush2.msra.mxu0 0.0
        %418 = vmatprep.subr.mxu0 0.0
        %419 = vmatpush2.msra.mxu0 0.0
        %420 = vmatprep.subr.mxu0 0.0
        %421 = vmatpush2.msra.mxu0 0.0
        %422 = vmatprep.subr.mxu0 0.0
        %423 = vmatpush2.msra.mxu0 0.0
        %424 = vmatprep.subr.mxu0 0.0
        %425 = vmatpush2.msra.mxu0 0.0
        %426 = vmatprep.subr.mxu0 0.0
        %427 = vmatpush2.msra.mxu0 0.0
        %428 = vmatprep.subr.mxu0 0.0
        %429 = vmatpush2.msra.mxu0 0.0
        %430 = vmatprep.subr.mxu0 0.0
        %431 = vmatpush2.msra.mxu0 0.0
        %432 = vmatprep.subr.mxu0 0.0
        %433 = vmatpush2.msra.mxu0 0.0
        %434 = vmatprep.subr.mxu0 0.0
        %435 = vmatpush2.msra.mxu0 0.0
        %436 = vmatprep.subr.mxu0 0.0
        %437 = vmatpush2.msra.mxu0 0.0
        %438 = vmatprep.mubr.f32.mxu0 0.0
        %439 = vmatmul.mubr.f32.gmra.mxu0 %v344
        %v440 = vpop.f32.mrf.mxu0
        %v441 = vadd.f32 0.0, %v440
        %v442 = vpop.f32.mrf.mxu0
        %443 = vmatprep.mubr.f32.mxu0 0.0
        %444 = vmatmul.mubr.f32.gmra.mxu0 %v347
        %v445 = vpop.f32.mrf.mxu0
        %v446 = vadd.f32 0.0, %v445
        %v447 = vpop.f32.mrf.mxu0
        %448 = vmatprep.mubr.f32.mxu0 0.0
        %449 = vmatmul.mubr.f32.gmra.mxu0 %v350
        %v450 = vpop.f32.mrf.mxu0
        %v451 = vadd.f32 0.0, %v450
        %v452 = vpop.f32.mrf.mxu0
        %453 = vmatprep.mubr.f32.mxu0 0.0
        %454 = vmatmul.mubr.f32.gmra.mxu0 %v353
        %v455 = vpop.f32.mrf.mxu0
        %v456 = vadd.f32 0.0, %v455
        %v457 = vpop.f32.mrf.mxu0
        %458 = vmatprep.mubr.f32.mxu0 0.0
        %459 = vmatmul.mubr.f32.gmra.mxu0 %v356
        %v460 = vpop.f32.mrf.mxu0
        %v461 = vadd.f32 0.0, %v460
        %v462 = vpop.f32.mrf.mxu0
        %463 = vmatprep.mubr.f32.mxu0 0.0
        %464 = vmatmul.mubr.f32.gmra.mxu0 %v359
        %v465 = vpop.f32.mrf.mxu0
        %v466 = vadd.f32 0.0, %v465
        %v467 = vpop.f32.mrf.mxu0
        %468 = vmatprep.mubr.f32.mxu0 0.0
        %469 = vmatmul.mubr.f32.gmra.mxu0 %v362
        %v470 = vpop.f32.mrf.mxu0
        %v471 = vadd.f32 0.0, %v470
        %v472 = vpop.f32.mrf.mxu0
        %473 = vmatprep.mubr.f32.mxu0 0.0
        %474 = vmatmul.mubr.f32.gmra.mxu0 %v365
        %v475 = vpop.f32.mrf.mxu0
        %v476 = vadd.f32 0.0, %v475
        %v477 = vpop.f32.mrf.mxu0
        %478 = vmatprep.mubr.f32.mxu0 0.0
        %479 = vmatmul.mubr.f32.gmra.mxu0 %v368
        %v480 = vpop.f32.mrf.mxu0
        %v481 = vadd.f32 0.0, %v480
        %v482 = vpop.f32.mrf.mxu0
        %483 = vdwg.mxu0
        %v485 = vsel %vm342, %v323, 0
        %v488 = vsel %vm342, %v324, 0
        %v491 = vsel %vm342, %v325, 0
        %v494 = vsel %vm342, %v326, 0
        %v497 = vsel %vm342, %v327, 0
        %v500 = vsel %vm342, %v328, 0
        %v503 = vsel %vm342, %v329, 0
        %v506 = vsel %vm342, %v330, 0
        %v509 = vsel %vm342, %v331, 0
        %v512 = vsel %vm370, %v320, 0
        %514 = vmatprep.subr.mxu0 0.0
        %515 = vmatpush1.msra.mxu0 0.0
        %516 = vmatprep.subr.mxu0 0.0
        %517 = vmatpush1.msra.mxu0 0.0
        %518 = vmatprep.subr.mxu0 0.0
        %519 = vmatpush1.msra.mxu0 0.0
        %520 = vmatprep.subr.mxu0 0.0
        %521 = vmatpush1.msra.mxu0 0.0
        %522 = vmatprep.subr.mxu0 0.0
        %523 = vmatpush1.msra.mxu0 0.0
        %524 = vmatprep.subr.mxu0 0.0
        %525 = vmatpush1.msra.mxu0 0.0
        %526 = vmatprep.subr.mxu0 0.0
        %527 = vmatpush1.msra.mxu0 0.0
        %528 = vmatprep.subr.mxu0 0.0
        %529 = vmatpush1.msra.mxu0 0.0
        %530 = vmatprep.subr.mxu0 0.0
        %531 = vmatpush1.msra.mxu0 0.0
        %532 = vmatprep.subr.mxu0 0.0
        %533 = vmatpush1.msra.mxu0 0.0
        %534 = vmatprep.subr.mxu0 0.0
        %535 = vmatpush1.msra.mxu0 0.0
        %536 = vmatprep.subr.mxu0 0.0
        %537 = vmatpush1.msra.mxu0 0.0
        %538 = vmatprep.subr.mxu0 0.0
        %539 = vmatpush1.msra.mxu0 0.0
        %540 = vmatprep.subr.mxu0 0.0
        %541 = vmatpush1.msra.mxu0 0.0
        %542 = vmatprep.subr.mxu0 0.0
        %543 = vmatpush1.msra.mxu0 0.0
        %544 = vmatprep.subr.mxu0 0.0
        %545 = vmatpush1.msra.mxu0 %v512
        %546 = vmatprep.subr.mxu0 0.0
        %547 = vmatpush2.msra.mxu0 0.0
        %548 = vmatprep.subr.mxu0 0.0
        %549 = vmatpush2.msra.mxu0 0.0
        %550 = vmatprep.subr.mxu0 0.0
        %551 = vmatpush2.msra.mxu0 0.0
        %552 = vmatprep.subr.mxu0 0.0
        %553 = vmatpush2.msra.mxu0 0.0
        %554 = vmatprep.subr.mxu0 0.0
        %555 = vmatpush2.msra.mxu0 0.0
        %556 = vmatprep.subr.mxu0 0.0
        %557 = vmatpush2.msra.mxu0 0.0
        %558 = vmatprep.subr.mxu0 0.0
        %559 = vmatpush2.msra.mxu0 0.0
        %560 = vmatprep.subr.mxu0 0.0
        %561 = vmatpush2.msra.mxu0 0.0
        %562 = vmatprep.subr.mxu0 0.0
        %563 = vmatpush2.msra.mxu0 0.0
        %564 = vmatprep.subr.mxu0 0.0
        %565 = vmatpush2.msra.mxu0 0.0
        %566 = vmatprep.subr.mxu0 0.0
        %567 = vmatpush2.msra.mxu0 0.0
        %568 = vmatprep.subr.mxu0 0.0
        %569 = vmatpush2.msra.mxu0 0.0
        %570 = vmatprep.subr.mxu0 0.0
        %571 = vmatpush2.msra.mxu0 0.0
        %572 = vmatprep.subr.mxu0 0.0
        %573 = vmatpush2.msra.mxu0 0.0
        %574 = vmatprep.subr.mxu0 0.0
        %575 = vmatpush2.msra.mxu0 0.0
        %576 = vmatprep.subr.mxu0 0.0
        %577 = vmatpush2.msra.mxu0 0.0
        %578 = vmatprep.mubr.f32.mxu0 0.0
        %579 = vmatmul.mubr.f32.gmra.mxu0 %v485
        %v580 = vpop.f32.mrf.mxu0
        %v581 = vadd.f32 %v441, %v580
        %v582 = vpop.f32.mrf.mxu0
        %583 = vmatprep.mubr.f32.mxu0 0.0
        %584 = vmatmul.mubr.f32.gmra.mxu0 %v488
        %v585 = vpop.f32.mrf.mxu0
        %v586 = vadd.f32 %v446, %v585
        %v587 = vpop.f32.mrf.mxu0
        %588 = vmatprep.mubr.f32.mxu0 0.0
        %589 = vmatmul.mubr.f32.gmra.mxu0 %v491
        %v590 = vpop.f32.mrf.mxu0
        %v591 = vadd.f32 %v451, %v590
        %v592 = vpop.f32.mrf.mxu0
        %593 = vmatprep.mubr.f32.mxu0 0.0
        %594 = vmatmul.mubr.f32.gmra.mxu0 %v494
        %v595 = vpop.f32.mrf.mxu0
        %v596 = vadd.f32 %v456, %v595
        %v597 = vpop.f32.mrf.mxu0
        %598 = vmatprep.mubr.f32.mxu0 0.0
        %599 = vmatmul.mubr.f32.gmra.mxu0 %v497
        %v600 = vpop.f32.mrf.mxu0
        %v601 = vadd.f32 %v461, %v600
        %v602 = vpop.f32.mrf.mxu0
        %603 = vmatprep.mubr.f32.mxu0 0.0
        %604 = vmatmul.mubr.f32.gmra.mxu0 %v500
        %v605 = vpop.f32.mrf.mxu0
        %v606 = vadd.f32 %v466, %v605
        %v607 = vpop.f32.mrf.mxu0
        %608 = vmatprep.mubr.f32.mxu0 0.0
        %609 = vmatmul.mubr.f32.gmra.mxu0 %v503
        %v610 = vpop.f32.mrf.mxu0
        %v611 = vadd.f32 %v471, %v610
        %v612 = vpop.f32.mrf.mxu0
        %613 = vmatprep.mubr.f32.mxu0 0.0
        %614 = vmatmul.mubr.f32.gmra.mxu0 %v506
        %v615 = vpop.f32.mrf.mxu0
        %v616 = vadd.f32 %v476, %v615
        %v617 = vpop.f32.mrf.mxu0
        %618 = vmatprep.mubr.f32.mxu0 0.0
        %619 = vmatmul.mubr.f32.gmra.mxu0 %v509
        %v620 = vpop.f32.mrf.mxu0
        %v621 = vadd.f32 %v481, %v620
        %v622 = vpop.f32.mrf.mxu0
        %623 = vdwg.mxu0
        %s624 = scalar_lea.vmem %s3, 144
        %v625 = vld [vmem:[%s624] sm:$0xff]
        %v626 = vld [vmem:[%s624 + $0x8] sm:$0xff]
        %v627 = vld [vmem:[%s624 + $0x10] sm:$0xff]
        %v628 = vld [vmem:[%s624 + $0x18] sm:$0xff]
        %v629 = vld [vmem:[%s624 + $0x20] sm:$0xff]
        %v630 = vld [vmem:[%s624 + $0x28] sm:$0xff]
        %v631 = vld [vmem:[%s624 + $0x30] sm:$0xff]
        %v632 = vld [vmem:[%s624 + $0x38] sm:$0xff]
        %v633 = vld [vmem:[%s624 + $0x40] sm:$0xff]
        %v635 = vsel %vm342, %v625, 0
        %v638 = vsel %vm342, %v626, 0
        %v641 = vsel %vm342, %v627, 0
        %v644 = vsel %vm342, %v628, 0
        %v647 = vsel %vm342, %v629, 0
        %v650 = vsel %vm342, %v630, 0
        %v653 = vsel %vm342, %v631, 0
        %v656 = vsel %vm342, %v632, 0
        %v659 = vsel %vm342, %v633, 0
        %v662 = vsel %vm370, %v322, 0
        %664 = vmatprep.subr.mxu0 0.0
        %665 = vmatpush1.msra.mxu0 0.0
        %666 = vmatprep.subr.mxu0 0.0
        %667 = vmatpush1.msra.mxu0 0.0
        %668 = vmatprep.subr.mxu0 0.0
        %669 = vmatpush1.msra.mxu0 0.0
        %670 = vmatprep.subr.mxu0 0.0
        %671 = vmatpush1.msra.mxu0 0.0
        %672 = vmatprep.subr.mxu0 0.0
        %673 = vmatpush1.msra.mxu0 0.0
        %674 = vmatprep.subr.mxu0 0.0
        %675 = vmatpush1.msra.mxu0 0.0
        %676 = vmatprep.subr.mxu0 0.0
        %677 = vmatpush1.msra.mxu0 0.0
        %678 = vmatprep.subr.mxu0 0.0
        %679 = vmatpush1.msra.mxu0 0.0
        %680 = vmatprep.subr.mxu0 0.0
        %681 = vmatpush1.msra.mxu0 0.0
        %682 = vmatprep.subr.mxu0 0.0
        %683 = vmatpush1.msra.mxu0 0.0
        %684 = vmatprep.subr.mxu0 0.0
        %685 = vmatpush1.msra.mxu0 0.0
        %686 = vmatprep.subr.mxu0 0.0
        %687 = vmatpush1.msra.mxu0 0.0
        %688 = vmatprep.subr.mxu0 0.0
        %689 = vmatpush1.msra.mxu0 0.0
        %690 = vmatprep.subr.mxu0 0.0
        %691 = vmatpush1.msra.mxu0 0.0
        %692 = vmatprep.subr.mxu0 0.0
        %693 = vmatpush1.msra.mxu0 0.0
        %694 = vmatprep.subr.mxu0 0.0
        %695 = vmatpush1.msra.mxu0 %v662
        %696 = vmatprep.subr.mxu0 0.0
        %697 = vmatpush2.msra.mxu0 0.0
        %698 = vmatprep.subr.mxu0 0.0
        %699 = vmatpush2.msra.mxu0 0.0
        %700 = vmatprep.subr.mxu0 0.0
        %701 = vmatpush2.msra.mxu0 0.0
        %702 = vmatprep.subr.mxu0 0.0
        %703 = vmatpush2.msra.mxu0 0.0
        %704 = vmatprep.subr.mxu0 0.0
        %705 = vmatpush2.msra.mxu0 0.0
        %706 = vmatprep.subr.mxu0 0.0
        %707 = vmatpush2.msra.mxu0 0.0
        %708 = vmatprep.subr.mxu0 0.0
        %709 = vmatpush2.msra.mxu0 0.0
        %710 = vmatprep.subr.mxu0 0.0
        %711 = vmatpush2.msra.mxu0 0.0
        %712 = vmatprep.subr.mxu0 0.0
        %713 = vmatpush2.msra.mxu0 0.0
        %714 = vmatprep.subr.mxu0 0.0
        %715 = vmatpush2.msra.mxu0 0.0
        %716 = vmatprep.subr.mxu0 0.0
        %717 = vmatpush2.msra.mxu0 0.0
        %718 = vmatprep.subr.mxu0 0.0
        %719 = vmatpush2.msra.mxu0 0.0
        %720 = vmatprep.subr.mxu0 0.0
        %721 = vmatpush2.msra.mxu0 0.0
        %722 = vmatprep.subr.mxu0 0.0
        %723 = vmatpush2.msra.mxu0 0.0
        %724 = vmatprep.subr.mxu0 0.0
        %725 = vmatpush2.msra.mxu0 0.0
        %726 = vmatprep.subr.mxu0 0.0
        %727 = vmatpush2.msra.mxu0 0.0
        %728 = vmatprep.mubr.f32.mxu0 0.0
        %729 = vmatmul.mubr.f32.gmra.mxu0 %v635
        %v730 = vpop.f32.mrf.mxu0
        %v731 = vadd.f32 0.0, %v730
        %v732 = vpop.f32.mrf.mxu0
        %733 = vmatprep.mubr.f32.mxu0 0.0
        %734 = vmatmul.mubr.f32.gmra.mxu0 %v638
        %v735 = vpop.f32.mrf.mxu0
        %v736 = vadd.f32 0.0, %v735
        %v737 = vpop.f32.mrf.mxu0
        %738 = vmatprep.mubr.f32.mxu0 0.0
        %739 = vmatmul.mubr.f32.gmra.mxu0 %v641
        %v740 = vpop.f32.mrf.mxu0
        %v741 = vadd.f32 0.0, %v740
        %v742 = vpop.f32.mrf.mxu0
        %743 = vmatprep.mubr.f32.mxu0 0.0
        %744 = vmatmul.mubr.f32.gmra.mxu0 %v644
        %v745 = vpop.f32.mrf.mxu0
        %v746 = vadd.f32 0.0, %v745
        %v747 = vpop.f32.mrf.mxu0
        %748 = vmatprep.mubr.f32.mxu0 0.0
        %749 = vmatmul.mubr.f32.gmra.mxu0 %v647
        %v750 = vpop.f32.mrf.mxu0
        %v751 = vadd.f32 0.0, %v750
        %v752 = vpop.f32.mrf.mxu0
        %753 = vmatprep.mubr.f32.mxu0 0.0
        %754 = vmatmul.mubr.f32.gmra.mxu0 %v650
        %v755 = vpop.f32.mrf.mxu0
        %v756 = vadd.f32 0.0, %v755
        %v757 = vpop.f32.mrf.mxu0
        %758 = vmatprep.mubr.f32.mxu0 0.0
        %759 = vmatmul.mubr.f32.gmra.mxu0 %v653
        %v760 = vpop.f32.mrf.mxu0
        %v761 = vadd.f32 0.0, %v760
        %v762 = vpop.f32.mrf.mxu0
        %763 = vmatprep.mubr.f32.mxu0 0.0
        %764 = vmatmul.mubr.f32.gmra.mxu0 %v656
        %v765 = vpop.f32.mrf.mxu0
        %v766 = vadd.f32 0.0, %v765
        %v767 = vpop.f32.mrf.mxu0
        %768 = vmatprep.mubr.f32.mxu0 0.0
        %769 = vmatmul.mubr.f32.gmra.mxu0 %v659
        %v770 = vpop.f32.mrf.mxu0
        %v771 = vadd.f32 0.0, %v770
        %v772 = vpop.f32.mrf.mxu0
        %773 = vdwg.mxu0
        %v774 = vadd.f32 %v581, %v731
        %v775 = vadd.f32 %v586, %v736
        %v776 = vadd.f32 %v591, %v741
        %v777 = vadd.f32 %v596, %v746
        %v778 = vadd.f32 %v601, %v751
        %v779 = vadd.f32 %v606, %v756
        %v780 = vadd.f32 %v611, %v761
        %v781 = vadd.f32 %v616, %v766
        %v782 = vadd.f32 %v621, %v771
        %v783 = vadd.f32 %v774, 0.0
        %785 = vrot.lane.b32.xlu0 %v775, 127
        %v786 = vpop.permute.xlu0 %785
        %v788 = vadd.f32 %v783, %v786
        %790 = vrot.lane.b32.xlu0 %v776, 126
        %v791 = vpop.permute.xlu0 %790
        %v793 = vadd.f32 %v788, %v791
        %795 = vrot.lane.b32.xlu0 %v777, 118
        %v796 = vpop.permute.xlu0 %795
        %v798 = vadd.f32 %v793, %v796
        %800 = vrot.lane.b32.xlu0 %v778, 117
        %v801 = vpop.permute.xlu0 %800
        %v803 = vadd.f32 %v798, %v801
        %805 = vrot.lane.b32.xlu0 %v779, 116
        %v806 = vpop.permute.xlu0 %805
        %v808 = vadd.f32 %v803, %v806
        %810 = vrot.lane.b32.xlu0 %v780, 108
        %v811 = vpop.permute.xlu0 %810
        %v813 = vadd.f32 %v808, %v811
        %815 = vrot.lane.b32.xlu0 %v781, 107
        %v816 = vpop.permute.xlu0 %815
        %v818 = vadd.f32 %v813, %v816
        %820 = vrot.lane.b32.xlu0 %v782, 106
        %v821 = vpop.permute.xlu0 %820
        %v823 = vadd.f32 %v818, %v821
        %v824 = vld [vmem:[%s4] sm:$0xff]
        %826 = vset.pattern.permute.xlu0 0
        %827 = vperm.xlu0 %826, %v824
        %v828 = vpop.permute.xlu0 %827
        %v830 = vadd.f32 %v823, %v828
        %v831 = vmax.f32 %v830, 0.0
        %v833 = vunpack.c.l.s4 1966171168
        %v834 = vunpack.c.0.s8 %v833
        %v835 = vlaneseq
        %v836 = vshrl.u32 %v835, 7
        %v837 = vsub.s32 %v834, %v836
        %v838 = vrot.slane %v321, %v837
        %v839 = vcombine.high %v838, %v838
        %v841 = vunpack.c.l.s4 1966171168
        %v842 = vunpack.c.0.s8 %v841
        %v843 = vlaneseq
        %v844 = vshrl.u32 %v843, 7
        %v845 = vsub.s32 %v842, %v844
        %v846 = vrot.slane %v838, %v845
        %v848 = vunpack.c.l.s4 1966171168
        %v849 = vunpack.c.0.s8 %v848
        %v850 = vlaneseq
        %v851 = vshrl.u32 %v850, 7
        %v852 = vsub.s32 %v849, %v851
        %v853 = vrot.slane %v839, %v852
        %v854 = vcombine.high %v846, %v846
        %v855 = vcombine.high %v853, %v853
        %v856 = vlaneseq
        %v857 = vshrl.u32 %v856, 7
        %v858 = vsub.s32 0, %v857
        %v859 = vrot.slane %v846, %v858
        %v860 = vlaneseq
        %v861 = vshrl.u32 %v860, 7
        %v862 = vsub.s32 0, %v861
        %v863 = vrot.slane %v853, %v862
        %v864 = vlaneseq
        %v865 = vshrl.u32 %v864, 7
        %v866 = vsub.s32 0, %v865
        %v867 = vrot.slane %v854, %v866
        %v868 = vlaneseq
        %v869 = vshrl.u32 %v868, 7
        %v870 = vsub.s32 0, %v869
        %v871 = vrot.slane %v855, %v870
        %872 = vrot.lane.b32.xlu0 %v859, 117
        %v873 = vpop.permute.xlu0 %872
        %874 = vrot.lane.b32.xlu0 %v863, 117
        %v875 = vpop.permute.xlu0 %874
        %876 = vrot.lane.b32.xlu0 %v867, 117
        %v877 = vpop.permute.xlu0 %876
        %878 = vrot.lane.b32.xlu0 %v871, 117
        %v879 = vpop.permute.xlu0 %878
        %vm884 = vcmask 57344
        %885 = vst.msk [vmem:[%s291] sm:$0x1] %vm884, %v873
        %886 = vst.msk [vmem:[%s291 + $0x8] sm:$0x1] %vm884, %v875
        %887 = vst.msk [vmem:[%s291 + $0x10] sm:$0x1] %vm884, %v877
        %888 = vst.msk [vmem:[%s291 + $0x18] sm:$0x1] %vm884, %v879
        %v890 = vcombine.high %v831, %v831
        %v892 = vunpack.c.l.s4 1966171168
        %v893 = vunpack.c.0.s8 %v892
        %v894 = vlaneseq
        %v895 = vshrl.u32 %v894, 7
        %v896 = vsub.s32 %v893, %v895
        %v897 = vrot.slane %v831, %v896
        %v899 = vunpack.c.l.s4 1966171168
        %v900 = vunpack.c.0.s8 %v899
        %v901 = vlaneseq
        %v902 = vshrl.u32 %v901, 7
        %v903 = vsub.s32 %v900, %v902
        %v904 = vrot.slane %v890, %v903
        %v905 = vcombine.high %v897, %v897
        %v906 = vcombine.high %v904, %v904
        %v908 = vunpack.c.l.s4 1966171168
        %v909 = vunpack.c.0.s8 %v908
        %v910 = vlaneseq
        %v911 = vshrl.u32 %v910, 7
        %v912 = vsub.s32 %v909, %v911
        %v913 = vrot.slane %v897, %v912
        %v915 = vunpack.c.l.s4 1966171168
        %v916 = vunpack.c.0.s8 %v915
        %v917 = vlaneseq
        %v918 = vshrl.u32 %v917, 7
        %v919 = vsub.s32 %v916, %v918
        %v920 = vrot.slane %v904, %v919
        %v922 = vunpack.c.l.s4 1966171168
        %v923 = vunpack.c.0.s8 %v922
        %v924 = vlaneseq
        %v925 = vshrl.u32 %v924, 7
        %v926 = vsub.s32 %v923, %v925
        %v927 = vrot.slane %v905, %v926
        %v929 = vunpack.c.l.s4 1966171168
        %v930 = vunpack.c.0.s8 %v929
        %v931 = vlaneseq
        %v932 = vshrl.u32 %v931, 7
        %v933 = vsub.s32 %v930, %v932
        %v934 = vrot.slane %v906, %v933
        %v935 = vcombine.high %v913, %v913
        %v936 = vcombine.high %v920, %v920
        %v937 = vcombine.high %v927, %v927
        %v938 = vcombine.high %v934, %v934
        %s947 = scalar_lea.vmem %s291, 32 [#allocation2]
        %948 = vst.msk [vmem:[%s947] sm:$0x1] %vm884, %v913
        %949 = vst.msk [vmem:[%s947 + $0x8] sm:$0x1] %vm884, %v927
        %950 = vst.msk [vmem:[%s947 + $0x10] sm:$0x1] %vm884, %v935
        %951 = vst.msk [vmem:[%s947 + $0x18] sm:$0x1] %vm884, %v937
        %952 = vst.msk [vmem:[%s947 + $0x20] sm:$0x1] %vm884, %v920
        %953 = vst.msk [vmem:[%s947 + $0x28] sm:$0x1] %vm884, %v934
        %954 = vst.msk [vmem:[%s947 + $0x30] sm:$0x1] %vm884, %v936
        %955 = vst.msk [vmem:[%s947 + $0x38] sm:$0x1] %vm884, %v938
        %956 = vrot.lane.b32.xlu0 %v859, 107
        %v957 = vpop.permute.xlu0 %956
        %958 = vrot.lane.b32.xlu0 %v863, 107
        %v959 = vpop.permute.xlu0 %958
        %960 = vrot.lane.b32.xlu0 %v867, 107
        %v961 = vpop.permute.xlu0 %960
        %962 = vrot.lane.b32.xlu0 %v871, 107
        %v963 = vpop.permute.xlu0 %962
        %968 = vst.msk [vmem:[%s291 + $0x1] sm:$0x1] %vm884, %v957
        %969 = vst.msk [vmem:[%s291 + $0x9] sm:$0x1] %vm884, %v959
        %970 = vst.msk [vmem:[%s291 + $0x11] sm:$0x1] %vm884, %v961
        %971 = vst.msk [vmem:[%s291 + $0x19] sm:$0x1] %vm884, %v963
        %v972 = vlaneseq
        %v973 = vshrl.u32 %v972, 7
        %v974 = vsub.s32 0, %v973
        %v975 = vrot.slane %v913, %v974
        %v976 = vlaneseq
        %v977 = vshrl.u32 %v976, 7
        %v978 = vsub.s32 0, %v977
        %v979 = vrot.slane %v927, %v978
        %v980 = vlaneseq
        %v981 = vshrl.u32 %v980, 7
        %v982 = vsub.s32 0, %v981
        %v983 = vrot.slane %v935, %v982
        %v984 = vlaneseq
        %v985 = vshrl.u32 %v984, 7
        %v986 = vsub.s32 0, %v985
        %v987 = vrot.slane %v937, %v986
        %v988 = vlaneseq
        %v989 = vshrl.u32 %v988, 7
        %v990 = vsub.s32 0, %v989
        %v991 = vrot.slane %v920, %v990
        %v992 = vlaneseq
        %v993 = vshrl.u32 %v992, 7
        %v994 = vsub.s32 0, %v993
        %v995 = vrot.slane %v934, %v994
        %v996 = vlaneseq
        %v997 = vshrl.u32 %v996, 7
        %v998 = vsub.s32 0, %v997
        %v999 = vrot.slane %v936, %v998
        %v1000 = vlaneseq
        %v1001 = vshrl.u32 %v1000, 7
        %v1002 = vsub.s32 0, %v1001
        %v1003 = vrot.slane %v938, %v1002
        %1004 = vrot.lane.b32.xlu0 %v975, 118
        %v1005 = vpop.permute.xlu0 %1004
        %1006 = vrot.lane.b32.xlu0 %v979, 118
        %v1007 = vpop.permute.xlu0 %1006
        %1008 = vrot.lane.b32.xlu0 %v983, 118
        %v1009 = vpop.permute.xlu0 %1008
        %1010 = vrot.lane.b32.xlu0 %v987, 118
        %v1011 = vpop.permute.xlu0 %1010
        %1012 = vrot.lane.b32.xlu0 %v991, 118
        %v1013 = vpop.permute.xlu0 %1012
        %1014 = vrot.lane.b32.xlu0 %v995, 118
        %v1015 = vpop.permute.xlu0 %1014
        %1016 = vrot.lane.b32.xlu0 %v999, 118
        %v1017 = vpop.permute.xlu0 %1016
        %1018 = vrot.lane.b32.xlu0 %v1003, 118
        %v1019 = vpop.permute.xlu0 %1018
        %1028 = vst.msk [vmem:[%s947 + $0x1] sm:$0x1] %vm884, %v1005
        %1029 = vst.msk [vmem:[%s947 + $0x9] sm:$0x1] %vm884, %v1007
        %1030 = vst.msk [vmem:[%s947 + $0x11] sm:$0x1] %vm884, %v1009
        %1031 = vst.msk [vmem:[%s947 + $0x19] sm:$0x1] %vm884, %v1011
        %1032 = vst.msk [vmem:[%s947 + $0x21] sm:$0x1] %vm884, %v1013
        %1033 = vst.msk [vmem:[%s947 + $0x29] sm:$0x1] %vm884, %v1015
        %1034 = vst.msk [vmem:[%s947 + $0x31] sm:$0x1] %vm884, %v1017
        %1035 = vst.msk [vmem:[%s947 + $0x39] sm:$0x1] %vm884, %v1019
        %1036 = vrot.lane.b32.xlu0 %v859, 97
        %v1037 = vpop.permute.xlu0 %1036
        %1038 = vrot.lane.b32.xlu0 %v863, 97
        %v1039 = vpop.permute.xlu0 %1038
        %1040 = vrot.lane.b32.xlu0 %v867, 97
        %v1041 = vpop.permute.xlu0 %1040
        %1042 = vrot.lane.b32.xlu0 %v871, 97
        %v1043 = vpop.permute.xlu0 %1042
        %1048 = vst.msk [vmem:[%s291 + $0x2] sm:$0x1] %vm884, %v1037
        %1049 = vst.msk [vmem:[%s291 + $0xa] sm:$0x1] %vm884, %v1039
        %1050 = vst.msk [vmem:[%s291 + $0x12] sm:$0x1] %vm884, %v1041
        %1051 = vst.msk [vmem:[%s291 + $0x1a] sm:$0x1] %vm884, %v1043
        %1052 = vrot.lane.b32.xlu0 %v975, 108
        %v1053 = vpop.permute.xlu0 %1052
        %1054 = vrot.lane.b32.xlu0 %v979, 108
        %v1055 = vpop.permute.xlu0 %1054
        %1056 = vrot.lane.b32.xlu0 %v983, 108
        %v1057 = vpop.permute.xlu0 %1056
        %1058 = vrot.lane.b32.xlu0 %v987, 108
        %v1059 = vpop.permute.xlu0 %1058
        %1060 = vrot.lane.b32.xlu0 %v991, 108
        %v1061 = vpop.permute.xlu0 %1060
        %1062 = vrot.lane.b32.xlu0 %v995, 108
        %v1063 = vpop.permute.xlu0 %1062
        %1064 = vrot.lane.b32.xlu0 %v999, 108
        %v1065 = vpop.permute.xlu0 %1064
        %1066 = vrot.lane.b32.xlu0 %v1003, 108
        %v1067 = vpop.permute.xlu0 %1066
        %1076 = vst.msk [vmem:[%s947 + $0x2] sm:$0x1] %vm884, %v1053
        %1077 = vst.msk [vmem:[%s947 + $0xa] sm:$0x1] %vm884, %v1055
        %1078 = vst.msk [vmem:[%s947 + $0x12] sm:$0x1] %vm884, %v1057
        %1079 = vst.msk [vmem:[%s947 + $0x1a] sm:$0x1] %vm884, %v1059
        %1080 = vst.msk [vmem:[%s947 + $0x22] sm:$0x1] %vm884, %v1061
        %1081 = vst.msk [vmem:[%s947 + $0x2a] sm:$0x1] %vm884, %v1063
        %1082 = vst.msk [vmem:[%s947 + $0x32] sm:$0x1] %vm884, %v1065
        %1083 = vst.msk [vmem:[%s947 + $0x3a] sm:$0x1] %vm884, %v1067
        %1084 = vrot.lane.b32.xlu0 %v859, 87
        %v1085 = vpop.permute.xlu0 %1084
        %1086 = vrot.lane.b32.xlu0 %v863, 87
        %v1087 = vpop.permute.xlu0 %1086
        %1088 = vrot.lane.b32.xlu0 %v867, 87
        %v1089 = vpop.permute.xlu0 %1088
        %1090 = vrot.lane.b32.xlu0 %v871, 87
        %v1091 = vpop.permute.xlu0 %1090
        %1096 = vst.msk [vmem:[%s291 + $0x3] sm:$0x1] %vm884, %v1085
        %1097 = vst.msk [vmem:[%s291 + $0xb] sm:$0x1] %vm884, %v1087
        %1098 = vst.msk [vmem:[%s291 + $0x13] sm:$0x1] %vm884, %v1089
        %1099 = vst.msk [vmem:[%s291 + $0x1b] sm:$0x1] %vm884, %v1091
        %1100 = vrot.lane.b32.xlu0 %v975, 98
        %v1101 = vpop.permute.xlu0 %1100
        %1102 = vrot.lane.b32.xlu0 %v979, 98
        %v1103 = vpop.permute.xlu0 %1102
        %1104 = vrot.lane.b32.xlu0 %v983, 98
        %v1105 = vpop.permute.xlu0 %1104
        %1106 = vrot.lane.b32.xlu0 %v987, 98
        %v1107 = vpop.permute.xlu0 %1106
        %1108 = vrot.lane.b32.xlu0 %v991, 98
        %v1109 = vpop.permute.xlu0 %1108
        %1110 = vrot.lane.b32.xlu0 %v995, 98
        %v1111 = vpop.permute.xlu0 %1110
        %1112 = vrot.lane.b32.xlu0 %v999, 98
        %v1113 = vpop.permute.xlu0 %1112
        %1114 = vrot.lane.b32.xlu0 %v1003, 98
        %v1115 = vpop.permute.xlu0 %1114
        %1124 = vst.msk [vmem:[%s947 + $0x3] sm:$0x1] %vm884, %v1101
        %1125 = vst.msk [vmem:[%s947 + $0xb] sm:$0x1] %vm884, %v1103
        %1126 = vst.msk [vmem:[%s947 + $0x13] sm:$0x1] %vm884, %v1105
        %1127 = vst.msk [vmem:[%s947 + $0x1b] sm:$0x1] %vm884, %v1107
        %1128 = vst.msk [vmem:[%s947 + $0x23] sm:$0x1] %vm884, %v1109
        %1129 = vst.msk [vmem:[%s947 + $0x2b] sm:$0x1] %vm884, %v1111
        %1130 = vst.msk [vmem:[%s947 + $0x33] sm:$0x1] %vm884, %v1113
        %1131 = vst.msk [vmem:[%s947 + $0x3b] sm:$0x1] %vm884, %v1115
        %1132 = vrot.lane.b32.xlu0 %v859, 77
        %v1133 = vpop.permute.xlu0 %1132
        %1134 = vrot.lane.b32.xlu0 %v863, 77
        %v1135 = vpop.permute.xlu0 %1134
        %1136 = vrot.lane.b32.xlu0 %v867, 77
        %v1137 = vpop.permute.xlu0 %1136
        %1138 = vrot.lane.b32.xlu0 %v871, 77
        %v1139 = vpop.permute.xlu0 %1138
        %1144 = vst.msk [vmem:[%s291 + $0x4] sm:$0x1] %vm884, %v1133
        %1145 = vst.msk [vmem:[%s291 + $0xc] sm:$0x1] %vm884, %v1135
        %1146 = vst.msk [vmem:[%s291 + $0x14] sm:$0x1] %vm884, %v1137
        %1147 = vst.msk [vmem:[%s291 + $0x1c] sm:$0x1] %vm884, %v1139
        %1148 = vrot.lane.b32.xlu0 %v975, 88
        %v1149 = vpop.permute.xlu0 %1148
        %1150 = vrot.lane.b32.xlu0 %v979, 88
        %v1151 = vpop.permute.xlu0 %1150
        %1152 = vrot.lane.b32.xlu0 %v983, 88
        %v1153 = vpop.permute.xlu0 %1152
        %1154 = vrot.lane.b32.xlu0 %v987, 88
        %v1155 = vpop.permute.xlu0 %1154
        %1156 = vrot.lane.b32.xlu0 %v991, 88
        %v1157 = vpop.permute.xlu0 %1156
        %1158 = vrot.lane.b32.xlu0 %v995, 88
        %v1159 = vpop.permute.xlu0 %1158
        %1160 = vrot.lane.b32.xlu0 %v999, 88
        %v1161 = vpop.permute.xlu0 %1160
        %1162 = vrot.lane.b32.xlu0 %v1003, 88
        %v1163 = vpop.permute.xlu0 %1162
        %1172 = vst.msk [vmem:[%s947 + $0x4] sm:$0x1] %vm884, %v1149
        %1173 = vst.msk [vmem:[%s947 + $0xc] sm:$0x1] %vm884, %v1151
        %1174 = vst.msk [vmem:[%s947 + $0x14] sm:$0x1] %vm884, %v1153
        %1175 = vst.msk [vmem:[%s947 + $0x1c] sm:$0x1] %vm884, %v1155
        %1176 = vst.msk [vmem:[%s947 + $0x24] sm:$0x1] %vm884, %v1157
        %1177 = vst.msk [vmem:[%s947 + $0x2c] sm:$0x1] %vm884, %v1159
        %1178 = vst.msk [vmem:[%s947 + $0x34] sm:$0x1] %vm884, %v1161
        %1179 = vst.msk [vmem:[%s947 + $0x3c] sm:$0x1] %vm884, %v1163
        %1180 = vrot.lane.b32.xlu0 %v859, 67
        %v1181 = vpop.permute.xlu0 %1180
        %1182 = vrot.lane.b32.xlu0 %v863, 67
        %v1183 = vpop.permute.xlu0 %1182
        %1184 = vrot.lane.b32.xlu0 %v867, 67
        %v1185 = vpop.permute.xlu0 %1184
        %1186 = vrot.lane.b32.xlu0 %v871, 67
        %v1187 = vpop.permute.xlu0 %1186
        %1192 = vst.msk [vmem:[%s291 + $0x5] sm:$0x1] %vm884, %v1181
        %1193 = vst.msk [vmem:[%s291 + $0xd] sm:$0x1] %vm884, %v1183
        %1194 = vst.msk [vmem:[%s291 + $0x15] sm:$0x1] %vm884, %v1185
        %1195 = vst.msk [vmem:[%s291 + $0x1d] sm:$0x1] %vm884, %v1187
        %1196 = vrot.lane.b32.xlu0 %v975, 78
        %v1197 = vpop.permute.xlu0 %1196
        %1198 = vrot.lane.b32.xlu0 %v979, 78
        %v1199 = vpop.permute.xlu0 %1198
        %1200 = vrot.lane.b32.xlu0 %v983, 78
        %v1201 = vpop.permute.xlu0 %1200
        %1202 = vrot.lane.b32.xlu0 %v987, 78
        %v1203 = vpop.permute.xlu0 %1202
        %1204 = vrot.lane.b32.xlu0 %v991, 78
        %v1205 = vpop.permute.xlu0 %1204
        %1206 = vrot.lane.b32.xlu0 %v995, 78
        %v1207 = vpop.permute.xlu0 %1206
        %1208 = vrot.lane.b32.xlu0 %v999, 78
        %v1209 = vpop.permute.xlu0 %1208
        %1210 = vrot.lane.b32.xlu0 %v1003, 78
        %v1211 = vpop.permute.xlu0 %1210
        %1220 = vst.msk [vmem:[%s947 + $0x5] sm:$0x1] %vm884, %v1197
        %1221 = vst.msk [vmem:[%s947 + $0xd] sm:$0x1] %vm884, %v1199
        %1222 = vst.msk [vmem:[%s947 + $0x15] sm:$0x1] %vm884, %v1201
        %1223 = vst.msk [vmem:[%s947 + $0x1d] sm:$0x1] %vm884, %v1203
        %1224 = vst.msk [vmem:[%s947 + $0x25] sm:$0x1] %vm884, %v1205
        %1225 = vst.msk [vmem:[%s947 + $0x2d] sm:$0x1] %vm884, %v1207
        %1226 = vst.msk [vmem:[%s947 + $0x35] sm:$0x1] %vm884, %v1209
        %1227 = vst.msk [vmem:[%s947 + $0x3d] sm:$0x1] %vm884, %v1211
        %1228 = vrot.lane.b32.xlu0 %v859, 57
        %v1229 = vpop.permute.xlu0 %1228
        %1230 = vrot.lane.b32.xlu0 %v863, 57
        %v1231 = vpop.permute.xlu0 %1230
        %1232 = vrot.lane.b32.xlu0 %v867, 57
        %v1233 = vpop.permute.xlu0 %1232
        %1234 = vrot.lane.b32.xlu0 %v871, 57
        %v1235 = vpop.permute.xlu0 %1234
        %1240 = vst.msk [vmem:[%s291 + $0x6] sm:$0x1] %vm884, %v1229
        %1241 = vst.msk [vmem:[%s291 + $0xe] sm:$0x1] %vm884, %v1231
        %1242 = vst.msk [vmem:[%s291 + $0x16] sm:$0x1] %vm884, %v1233
        %1243 = vst.msk [vmem:[%s291 + $0x1e] sm:$0x1] %vm884, %v1235
        %1244 = vrot.lane.b32.xlu0 %v975, 68
        %v1245 = vpop.permute.xlu0 %1244
        %1246 = vrot.lane.b32.xlu0 %v979, 68
        %v1247 = vpop.permute.xlu0 %1246
        %1248 = vrot.lane.b32.xlu0 %v983, 68
        %v1249 = vpop.permute.xlu0 %1248
        %1250 = vrot.lane.b32.xlu0 %v987, 68
        %v1251 = vpop.permute.xlu0 %1250
        %1252 = vrot.lane.b32.xlu0 %v991, 68
        %v1253 = vpop.permute.xlu0 %1252
        %1254 = vrot.lane.b32.xlu0 %v995, 68
        %v1255 = vpop.permute.xlu0 %1254
        %1256 = vrot.lane.b32.xlu0 %v999, 68
        %v1257 = vpop.permute.xlu0 %1256
        %1258 = vrot.lane.b32.xlu0 %v1003, 68
        %v1259 = vpop.permute.xlu0 %1258
        %1268 = vst.msk [vmem:[%s947 + $0x6] sm:$0x1] %vm884, %v1245
        %1269 = vst.msk [vmem:[%s947 + $0xe] sm:$0x1] %vm884, %v1247
        %1270 = vst.msk [vmem:[%s947 + $0x16] sm:$0x1] %vm884, %v1249
        %1271 = vst.msk [vmem:[%s947 + $0x1e] sm:$0x1] %vm884, %v1251
        %1272 = vst.msk [vmem:[%s947 + $0x26] sm:$0x1] %vm884, %v1253
        %1273 = vst.msk [vmem:[%s947 + $0x2e] sm:$0x1] %vm884, %v1255
        %1274 = vst.msk [vmem:[%s947 + $0x36] sm:$0x1] %vm884, %v1257
        %1275 = vst.msk [vmem:[%s947 + $0x3e] sm:$0x1] %vm884, %v1259
        %1276 = vrot.lane.b32.xlu0 %v859, 47
        %v1277 = vpop.permute.xlu0 %1276
        %1278 = vrot.lane.b32.xlu0 %v863, 47
        %v1279 = vpop.permute.xlu0 %1278
        %1280 = vrot.lane.b32.xlu0 %v867, 47
        %v1281 = vpop.permute.xlu0 %1280
        %1282 = vrot.lane.b32.xlu0 %v871, 47
        %v1283 = vpop.permute.xlu0 %1282
        %1288 = vst.msk [vmem:[%s291 + $0x7] sm:$0x1] %vm884, %v1277
        %1289 = vst.msk [vmem:[%s291 + $0xf] sm:$0x1] %vm884, %v1279
        %1290 = vst.msk [vmem:[%s291 + $0x17] sm:$0x1] %vm884, %v1281
        %1291 = vst.msk [vmem:[%s291 + $0x1f] sm:$0x1] %vm884, %v1283
        %1292 = vrot.lane.b32.xlu0 %v975, 58
        %v1293 = vpop.permute.xlu0 %1292
        %1294 = vrot.lane.b32.xlu0 %v979, 58
        %v1295 = vpop.permute.xlu0 %1294
        %1296 = vrot.lane.b32.xlu0 %v983, 58
        %v1297 = vpop.permute.xlu0 %1296
        %1298 = vrot.lane.b32.xlu0 %v987, 58
        %v1299 = vpop.permute.xlu0 %1298
        %1300 = vrot.lane.b32.xlu0 %v991, 58
        %v1301 = vpop.permute.xlu0 %1300
        %1302 = vrot.lane.b32.xlu0 %v995, 58
        %v1303 = vpop.permute.xlu0 %1302
        %1304 = vrot.lane.b32.xlu0 %v999, 58
        %v1305 = vpop.permute.xlu0 %1304
        %1306 = vrot.lane.b32.xlu0 %v1003, 58
        %v1307 = vpop.permute.xlu0 %1306
        %1316 = vst.msk [vmem:[%s947 + $0x7] sm:$0x1] %vm884, %v1293
        %1317 = vst.msk [vmem:[%s947 + $0xf] sm:$0x1] %vm884, %v1295
        %1318 = vst.msk [vmem:[%s947 + $0x17] sm:$0x1] %vm884, %v1297
        %1319 = vst.msk [vmem:[%s947 + $0x1f] sm:$0x1] %vm884, %v1299
        %1320 = vst.msk [vmem:[%s947 + $0x27] sm:$0x1] %vm884, %v1301
        %1321 = vst.msk [vmem:[%s947 + $0x2f] sm:$0x1] %vm884, %v1303
        %1322 = vst.msk [vmem:[%s947 + $0x37] sm:$0x1] %vm884, %v1305
        %1323 = vst.msk [vmem:[%s947 + $0x3f] sm:$0x1] %vm884, %v1307
        %s1324 = sand.u32 %s168, 1
        %s1325 = sand.u32 %s168, 1
        %s1326 = smul.addr %s1325, 96
        %s1327 = scalar_lea.vmem [#allocation2], %s1326
        // Predicated region
        $region41: #{tpu_custom_call.1} parent=39 // pred_check
          %p1328 = pneg %p178
        $region42: #{tpu_custom_call.1} parent=39 // pred_check_branch
          %1330 = sbr.rel (%p1328) target = $region44
        $region43: #{tpu_custom_call.1} parent=39 // pred_region
          %s1331 = smul.addr %s20, 48
          %s1332 = sadd.s32 %s21, %s1331
          %s1333 = smul.addr %s1332, 8
          %s1334 = scalar_lea.vmem %s5, %s1333
          // Predicated region
          $region45: #{tpu_custom_call.1} parent=43 // pred_check
            _
          $region46: #{tpu_custom_call.1} parent=43 // pred_check_branch
            %1336 = sbr.rel (0) target = $region48
          $region47: #{tpu_custom_call.1} parent=43 // pred_region
            // Predicated region
            $region49: #{tpu_custom_call.1} parent=47 // pred_check
              _
            $region50: #{tpu_custom_call.1} parent=47 // pred_check_branch
              %1338 = sbr.rel (0) target = $region52
            $region51: #{tpu_custom_call.1} parent=47 // pred_region
              // Predicated region
              $region64: #{tpu_custom_call.1} parent=51 // pred_check
                _
              $region65: #{tpu_custom_call.1} parent=51 // pred_check_branch
                %1376 = sbr.rel (0) target = $region67
              $region66: #{tpu_custom_call.1} parent=51 // pred_region
                loop: start=0, step=1, limit=1
                $region68: #{tpu_custom_call.1} parent=66 // loop_pre_header
                  _
                $region69: #{tpu_custom_call.1} parent=66 // loop_header
                  %s1378 = sphi 0, %s1382
                  %p1379 = scmp.ge.s32.totalorder %s1378, 1
                  %s1383 = sphi %s1327, %s1327
                  %s1384 = sphi %s1334, %s1334
                $region70: #{tpu_custom_call.1} parent=66 // loop_header_branch
                  %1381 = sbr.rel (%p1379) target = $region74
                $region71: #{tpu_custom_call.1} parent=66 // loop_body
                  %v1385 = vld [vmem:[%s1383] sm:$0xff]
                  %1386 = vst [vmem:[%s1384] sm:$0xff] %v1385
                  %v1387 = vld [vmem:[%s1383 + $0x8] sm:$0xff]
                  %1388 = vst [vmem:[%s1384 + $0x20] sm:$0xff] %v1387
                  %v1389 = vld [vmem:[%s1383 + $0x10] sm:$0xff]
                  %1390 = vst [vmem:[%s1384 + $0x40] sm:$0xff] %v1389
                  %v1391 = vld [vmem:[%s1383 + $0x18] sm:$0xff]
                  %1392 = vst [vmem:[%s1384 + $0x60] sm:$0xff] %v1391
                  %v1393 = vld [vmem:[%s1383 + $0x20] sm:$0xff]
                  %1394 = vst [vmem:[%s1384 + $0x80] sm:$0xff] %v1393
                  %v1395 = vld [vmem:[%s1383 + $0x28] sm:$0xff]
                  %1396 = vst [vmem:[%s1384 + $0xa0] sm:$0xff] %v1395
                  %v1397 = vld [vmem:[%s1383 + $0x30] sm:$0xff]
                  %1398 = vst [vmem:[%s1384 + $0xc0] sm:$0xff] %v1397
                  %v1399 = vld [vmem:[%s1383 + $0x38] sm:$0xff]
                  %1400 = vst [vmem:[%s1384 + $0xe0] sm:$0xff] %v1399
                  %v1401 = vld [vmem:[%s1383 + $0x40] sm:$0xff]
                  %1402 = vst [vmem:[%s1384 + $0x100] sm:$0xff] %v1401
                  %v1403 = vld [vmem:[%s1383 + $0x48] sm:$0xff]
                  %1404 = vst [vmem:[%s1384 + $0x120] sm:$0xff] %v1403
                  %v1405 = vld [vmem:[%s1383 + $0x50] sm:$0xff]
                  %1406 = vst [vmem:[%s1384 + $0x140] sm:$0xff] %v1405
                  %v1407 = vld [vmem:[%s1383 + $0x58] sm:$0xff]
                  %1408 = vst [vmem:[%s1384 + $0x160] sm:$0xff] %v1407
                $region72: #{tpu_custom_call.1} parent=66 // loop_footer
                  %s1382 = sadd.s32 1, %s1378
                $region73: #{tpu_custom_call.1} parent=66 // loop_footer_branch
                  %1377 = sbr.rel target = $region69
                $region74: #{tpu_custom_call.1} parent=66 // loop_exit
                  _
              $region67: #{tpu_custom_call.1} parent=51 // pred_fallthru
                _
              // Predicated region
              $region75: #{tpu_custom_call.1} parent=51 // pred_check
                _
              $region76: #{tpu_custom_call.1} parent=51 // pred_check_branch
                %1410 = sbr.rel target = $region78
              $region77: #{tpu_custom_call.1} parent=51 // pred_region
                _
              $region78: #{tpu_custom_call.1} parent=51 // pred_fallthru
                _
            $region52: #{tpu_custom_call.1} parent=47 // pred_fallthru
              _
            // Predicated region
            $region53: #{tpu_custom_call.1} parent=47 // pred_check
              _
            $region54: #{tpu_custom_call.1} parent=47 // pred_check_branch
              %1340 = sbr.rel target = $region56
            $region55: #{tpu_custom_call.1} parent=47 // pred_region
              %s1342 = ssub.s32 256, 1
              loop: start=0, step=1, limit=1
              $region57: #{tpu_custom_call.1} parent=55 // loop_pre_header
                _
              $region58: #{tpu_custom_call.1} parent=55 // loop_header
                %s1344 = sphi 0, %s1348
                %p1345 = scmp.ge.s32.totalorder %s1344, 1
                %s1349 = sphi %s1327, %s1327
                %s1350 = sphi %s1334, %s1334
              $region59: #{tpu_custom_call.1} parent=55 // loop_header_branch
                %1347 = sbr.rel (%p1345) target = $region63
              $region60: #{tpu_custom_call.1} parent=55 // loop_body
                %v1351 = vld [vmem:[%s1349] sm:%s1342]
                %1352 = vst [vmem:[%s1350] sm:%s1342] %v1351
                %v1353 = vld [vmem:[%s1349 + $0x8] sm:%s1342]
                %1354 = vst [vmem:[%s1350 + $0x20] sm:%s1342] %v1353
                %v1355 = vld [vmem:[%s1349 + $0x10] sm:%s1342]
                %1356 = vst [vmem:[%s1350 + $0x40] sm:%s1342] %v1355
                %v1357 = vld [vmem:[%s1349 + $0x18] sm:%s1342]
                %1358 = vst [vmem:[%s1350 + $0x60] sm:%s1342] %v1357
                %v1359 = vld [vmem:[%s1349 + $0x20] sm:%s1342]
                %1360 = vst [vmem:[%s1350 + $0x80] sm:%s1342] %v1359
                %v1361 = vld [vmem:[%s1349 + $0x28] sm:%s1342]
                %1362 = vst [vmem:[%s1350 + $0xa0] sm:%s1342] %v1361
                %v1363 = vld [vmem:[%s1349 + $0x30] sm:%s1342]
                %1364 = vst [vmem:[%s1350 + $0xc0] sm:%s1342] %v1363
                %v1365 = vld [vmem:[%s1349 + $0x38] sm:%s1342]
                %1366 = vst [vmem:[%s1350 + $0xe0] sm:%s1342] %v1365
                %v1367 = vld [vmem:[%s1349 + $0x40] sm:%s1342]
                %1368 = vst [vmem:[%s1350 + $0x100] sm:%s1342] %v1367
                %v1369 = vld [vmem:[%s1349 + $0x48] sm:%s1342]
                %1370 = vst [vmem:[%s1350 + $0x120] sm:%s1342] %v1369
                %v1371 = vld [vmem:[%s1349 + $0x50] sm:%s1342]
                %1372 = vst [vmem:[%s1350 + $0x140] sm:%s1342] %v1371
                %v1373 = vld [vmem:[%s1349 + $0x58] sm:%s1342]
                %1374 = vst [vmem:[%s1350 + $0x160] sm:%s1342] %v1373
              $region61: #{tpu_custom_call.1} parent=55 // loop_footer
                %s1348 = sadd.s32 1, %s1344
              $region62: #{tpu_custom_call.1} parent=55 // loop_footer_branch
                %1343 = sbr.rel target = $region58
              $region63: #{tpu_custom_call.1} parent=55 // loop_exit
                _
            $region56: #{tpu_custom_call.1} parent=47 // pred_fallthru
              _
          $region48: #{tpu_custom_call.1} parent=43 // pred_fallthru
            _
          %1411 = vnop
        $region44: #{tpu_custom_call.1} parent=39 // pred_fallthru
          _
      $region40: #{tpu_custom_call.1} parent=5 // pred_fallthru
        _
      %p1412 = scmp.le.s32.totalorder 2, %s11
      // Predicated region
      $region79: #{tpu_custom_call.1} parent=5 // pred_check
        %p1413 = pneg %p1412
      $region80: #{tpu_custom_call.1} parent=5 // pred_check_branch
        %1415 = sbr.rel (%p1413) target = $region82
      $region81: #{tpu_custom_call.1} parent=5 // pred_region
        %s1416 = ssub.s32 %s11, 2
        // Predicated region
        $region83: #{tpu_custom_call.1} parent=81 // pred_check
          %p1417 = pneg %p184
        $region84: #{tpu_custom_call.1} parent=81 // pred_check_branch
          %1419 = sbr.rel (%p1417) target = $region86
        $region85: #{tpu_custom_call.1} parent=81 // pred_region
          %s1420 = sand.u32 %s169, 1
          %s1421 = sand.u32 %s169, 1
          %s1422 = smul.addr %s1421, 96
          %s1423 = scalar_lea.vmem [#allocation2], %s1422
        $region86: #{tpu_custom_call.1} parent=81 // pred_fallthru
          _
      $region82: #{tpu_custom_call.1} parent=5 // pred_fallthru
        _
    $region6: #{tpu_custom_call.1} parent=1 // loop_footer
      %s15 = sadd.s32 1, %s11
    $region7: #{tpu_custom_call.1} parent=1 // loop_footer_branch
      %10 = sbr.rel target = $region3
    $region8: #{tpu_custom_call.1} parent=1 // loop_exit
      _

</llo_original>
